<compile_context>
chip_gen: v6e
topology: v6e:2x2x1
jax: 0.10.0
libtpu: 0.0.40
codegen_flags: <defaults>
</compile_context>

<pallas_src>
import functools

import jax
import jax.numpy as jnp
from jax import lax
from jax.experimental import pallas as pl
from jax.experimental.pallas import tpu as pltpu


# ---------------------------------------------------------------------------
# Pallas kernel: one batch element per grid step, everything fused.
# ---------------------------------------------------------------------------
def _basic_block2_kernel(K, H, W, Wp, has_proj, *refs):
    if has_proj:
        (x_ref, mask_ref, w1_ref, b1_ref, w2_ref, b2_ref,
         wsc_ref, bsc_ref, out_ref, mid_ref) = refs
    else:
        (x_ref, mask_ref, w1_ref, b1_ref, w2_ref, b2_ref,
         out_ref, mid_ref) = refs

    P = out_ref.shape[1]
    S = H * Wp                      # conv output columns (padded-width layout)
    off0 = (K // 2) * (Wp + 1)      # flat offset of the spatial interior
    L = mid_ref.shape[1]

    x0 = x_ref[0]                   # (Cin, L) bf16, flattened padded input

    # ---- conv1 (BN1 scale folded into weights): K*K contiguous shifted
    # lane-slices, weights on the LHS, f32 accumulation ----
    acc1 = None
    for dy in range(K):
        for dx in range(K):
            off = dy * Wp + dx
            d = jnp.dot(w1_ref[dy * K + dx], x0[:, off:off + S],
                        preferred_element_type=jnp.float32)
            acc1 = d if acc1 is None else acc1 + d
    # BN1 bias + ReLU, then zero the wrap-around columns (x >= W) so they
    # become part of the zero halo of the conv2 input.
    out1 = jnp.maximum(acc1 + b1_ref[...], 0.0) * mask_ref[...]

    # ---- padded conv2 input (bf16 scratch): zero only the halo head/tail,
    # write the interior once ----
    mid_ref[:, :off0] = jnp.zeros((P, off0), mid_ref.dtype)
    mid_ref[:, off0 + S:] = jnp.zeros((P, L - off0 - S), mid_ref.dtype)
    mid_ref[:, off0:off0 + S] = out1.astype(mid_ref.dtype)

    # ---- conv2 (BN2 scale folded into weights) ----
    acc2 = None
    for dy in range(K):
        for dx in range(K):
            off = dy * Wp + dx
            d = jnp.dot(w2_ref[dy * K + dx], mid_ref[:, off:off + S],
                        preferred_element_type=jnp.float32)
            acc2 = d if acc2 is None else acc2 + d

    # ---- shortcut: interior of the padded input (no separate x stream) ----
    x_in = x0[:, off0:off0 + S]
    if has_proj:
        sc = jnp.dot(wsc_ref[...], x_in,
                     preferred_element_type=jnp.float32) + bsc_ref[...]
    else:
        sc = x_in.astype(jnp.float32)                  # identity: no matmul

    # lane-dense output slab (last dim = H*Wp)
    out_ref[0] = jnp.maximum(acc2 + b2_ref[...] + sc, 0.0)


# ---------------------------------------------------------------------------
# Wrapper: layout plumbing, BN folding, pallas_call setup.
# ---------------------------------------------------------------------------
def fold_bn(gamma, beta, mean, var, eps=1e-5):
    scale = gamma / jnp.sqrt(var + eps)
    bias = beta - mean * scale
    return scale.astype(jnp.float32), bias.astype(jnp.float32)


def basic_block2_forward(x_nchw, params, *, kernel_size=3, stride=1):
    assert stride == 1, "kernel only implements stride == 1"
    N, Cin, H, W = x_nchw.shape
    K = kernel_size
    pad = K // 2
    Hp, Wp = H + 2 * pad, W + 2 * pad
    S = H * Wp
    # flat padded length: room for the largest shifted read, rounded to lanes
    L = -(-(Hp * Wp + K - 1) // 128) * 128

    P = params["conv1_w"].shape[0]
    has_proj = (stride != 1) or (Cin != P)

    # ---- input: NCHW -> flattened zero-padded (N, Cin, L), bf16 ----
    xpad = jnp.pad(x_nchw.astype(jnp.float32),
                   ((0, 0), (0, 0), (pad, pad), (pad, pad)))
    xflat = xpad.reshape(N, Cin, Hp * Wp)
    xflat = jnp.pad(xflat, ((0, 0), (0, 0), (0, L - Hp * Wp)))
    xflat = xflat.astype(jnp.bfloat16)

    # ---- folded BN params; scales are baked into the conv weights ----
    s1, b1 = fold_bn(*params["bn1"])
    s2, b2 = fold_bn(*params["bn2"])

    # weights: OIHW * scale[O] -> (K*K, P, C) per-tap weights-on-LHS, bf16
    w1 = params["conv1_w"] * s1[:, None, None, None]
    w2 = params["conv2_w"] * s2[:, None, None, None]
    w1 = jnp.transpose(w1, (2, 3, 0, 1)).reshape(K * K, P, Cin).astype(jnp.bfloat16)
    w2 = jnp.transpose(w2, (2, 3, 0, 1)).reshape(K * K, P, P).astype(jnp.bfloat16)

    # biases as (P, 1) columns (channels on sublanes)
    b1c, b2c = b1.reshape(P, 1), b2.reshape(P, 1)

    # validity mask over the padded-width output columns (zero where x >= W)
    col = jnp.arange(S, dtype=jnp.int32) % Wp
    mask = (col < W).astype(jnp.float32).reshape(1, S)

    full = lambda shape: pl.BlockSpec(shape, lambda n: (0,) * len(shape))

    in_specs = [
        pl.BlockSpec((1, Cin, L), lambda n: (n, 0, 0)),   # xflat (per batch elem)
        full((1, S)),                                     # column mask
        full((K * K, P, Cin)),                            # w1 (scale-folded)
        full((P, 1)),                                     # bn1 bias
        full((K * K, P, P)),                              # w2 (scale-folded)
        full((P, 1)),                                     # bn2 bias
    ]
    args = [xflat, mask, w1, b1c, w2, b2c]
    if has_proj:
        ssc, bsc = fold_bn(*params["bn_sc"])
        wsc = (params["shortcut_w"].reshape(P, Cin)
               * ssc[:, None]).astype(jnp.bfloat16)
        in_specs += [full((P, Cin)), full((P, 1))]
        args += [wsc, bsc.reshape(P, 1)]

    kernel = functools.partial(_basic_block2_kernel, K, H, W, Wp, has_proj)

    out_flat = pl.pallas_call(
        kernel,
        out_shape=jax.ShapeDtypeStruct((N, P, S), jnp.float32),
        grid_spec=pltpu.PrefetchScalarGridSpec(
            num_scalar_prefetch=0,
            grid=(N,),
            in_specs=in_specs,
            out_specs=pl.BlockSpec((1, P, S), lambda n: (n, 0, 0)),
            scratch_shapes=[pltpu.VMEM((P, L), jnp.bfloat16)],
        ),
        compiler_params=pltpu.CompilerParams(
            dimension_semantics=("parallel",),
            # Tiny at these shapes; raise toward 128 MiB on v5e/v6e and keep
            # resident bytes well under 64 MiB when tiling real ResNet shapes
            # for v7x.
            vmem_limit_bytes=32 * 1024 * 1024),
    )(*args)

    # (N, P, H*Wp) -> (N, P, H, Wp) -> drop pad columns -> NCHW (no transpose)
    return out_flat.reshape(N, P, H, Wp)[:, :, :, :W]


# ---------------------------------------------------------------------------
# Pure-JAX reference (NCHW, lax.conv, full f32) for correctness checking.
# ---------------------------------------------------------------------------
def basic_block2_reference(x, params, *, kernel_size=3, stride=1):
    pad = kernel_size // 2

    def conv(x, w, stride, pad):
        return lax.conv_general_dilated(
            x, w, window_strides=(stride, stride),
            padding=[(pad, pad), (pad, pad)],
            dimension_numbers=("NCHW", "OIHW", "NCHW"),
            precision=lax.Precision.HIGHEST)

    def bn(x, bn_params):
        s, b = fold_bn(*bn_params)
        return x * s[None, :, None, None] + b[None, :, None, None]

    out = jax.nn.relu(bn(conv(x, params["conv1_w"], stride, pad), params["bn1"]))
    out = bn(conv(out, params["conv2_w"], 1, pad), params["bn2"])
    Cin = x.shape[1]
    P = params["conv1_w"].shape[0]
    if stride != 1 or Cin != P:
        sc = bn(conv(x, params["shortcut_w"], stride, 0), params["bn_sc"])
    else:
        sc = x
    return jax.nn.relu(out + sc)


# ---------------------------------------------------------------------------
def make_params(key, in_planes, planes, kernel_size=3, stride=1):
    ks = jax.random.split(key, 16)
    K = kernel_size

    def bn_init(k):
        k1, k2, k3, k4 = jax.random.split(k, 4)
        gamma = jax.random.uniform(k1, (planes,), jnp.float32, 0.5, 1.5)
        beta = 0.1 * jax.random.normal(k2, (planes,), jnp.float32)
        mean = 0.1 * jax.random.normal(k3, (planes,), jnp.float32)
        var = jax.random.uniform(k4, (planes,), jnp.float32, 0.5, 1.5)
        return (gamma, beta, mean, var)

    params = {
        "conv1_w": 0.2 * jax.random.normal(ks[0], (planes, in_planes, K, K), jnp.float32),
        "bn1": bn_init(ks[1]),
        "conv2_w": 0.2 * jax.random.normal(ks[2], (planes, planes, K, K), jnp.float32),
        "bn2": bn_init(ks[3]),
    }
    if stride != 1 or in_planes != planes:
        params["shortcut_w"] = 0.2 * jax.random.normal(
            ks[4], (planes, in_planes, 1, 1), jnp.float32)
        params["bn_sc"] = bn_init(ks[5])
    return params


if __name__ == "__main__":
    key = jax.random.PRNGKey(0)

    # case 1: projection shortcut (in_planes != planes)
    # case 2: identity shortcut (in_planes == planes) -> no 1x1 matmul in kernel
    for (Cin, planes) in [(4, 8), (8, 8)]:
        key, k_x, k_p = jax.random.split(key, 3)
        N, H, W = 2, 16, 16
        kernel_size, stride = 3, 1

        x = jax.random.normal(k_x, (N, Cin, H, W), jnp.float32)
        params = make_params(k_p, Cin, planes, kernel_size, stride)

        out = basic_block2_forward(x, params, kernel_size=kernel_size, stride=stride)
        out = jax.block_until_ready(out)

        ref = basic_block2_reference(x, params, kernel_size=kernel_size, stride=stride)
        ref = jax.block_until_ready(ref)

        assert out.shape == (N, planes, H, W)
        err = float(jnp.max(jnp.abs(out - ref)))
        # kernel matmuls run in bf16 (f32 accumulation); reference is full f32
        assert jnp.allclose(out, ref, atol=1e-1, rtol=5e-2), err

    print("KERNEL_OK")
</pallas_src>

<mosaic_0001>
module attributes {stable_mosaic.version = 11 : i64} {
  func.func @_basic_block2_kernel(%arg0: i32, %arg1: memref<1x4x384xbf16, #tpu.memory_space<vmem>>, %arg2: memref<1x288xf32, #tpu.memory_space<vmem>>, %arg3: memref<9x8x4xbf16, #tpu.memory_space<vmem>>, %arg4: memref<8x1xf32, #tpu.memory_space<vmem>>, %arg5: memref<9x8x8xbf16, #tpu.memory_space<vmem>>, %arg6: memref<8x1xf32, #tpu.memory_space<vmem>>, %arg7: memref<8x4xbf16, #tpu.memory_space<vmem>>, %arg8: memref<8x1xf32, #tpu.memory_space<vmem>>, %arg9: memref<1x8x288xf32, #tpu.memory_space<vmem>>, %arg10: memref<8x384xbf16, #tpu.memory_space<vmem>>) attributes {dimension_semantics = [#tpu.dimension_semantics<parallel>], iteration_bounds = array<i64: 2>, scalar_prefetch = 0 : i64, scratch_operands = 1 : i64, tpu.core_type = #tpu.core_type<tc>, window_params = [{transform_indices = @transform_0, window_bounds = array<i64: 1, 4, 384>}, {pipeline_mode = #tpu.pipeline_mode<synchronous>, transform_indices = @transform_1, window_bounds = array<i64: 1, 288>}, {pipeline_mode = #tpu.pipeline_mode<synchronous>, transform_indices = @transform_2, window_bounds = array<i64: 9, 8, 4>}, {pipeline_mode = #tpu.pipeline_mode<synchronous>, transform_indices = @transform_3, window_bounds = array<i64: 8, 1>}, {pipeline_mode = #tpu.pipeline_mode<synchronous>, transform_indices = @transform_4, window_bounds = array<i64: 9, 8, 8>}, {pipeline_mode = #tpu.pipeline_mode<synchronous>, transform_indices = @transform_5, window_bounds = array<i64: 8, 1>}, {pipeline_mode = #tpu.pipeline_mode<synchronous>, transform_indices = @transform_6, window_bounds = array<i64: 8, 4>}, {pipeline_mode = #tpu.pipeline_mode<synchronous>, transform_indices = @transform_7, window_bounds = array<i64: 8, 1>}, {transform_indices = @transform_8, window_bounds = array<i64: 1, 8, 288>}]} {
    %c0 = arith.constant 0 : index
    %c0_0 = arith.constant 0 : index
    %c0_1 = arith.constant 0 : index
    %0 = vector.load %arg1[%c0, %c0_0, %c0_1] : memref<1x4x384xbf16, #tpu.memory_space<vmem>>, vector<1x4x384xbf16>
    %1 = vector.shape_cast %0 : vector<1x4x384xbf16> to vector<4x384xbf16>
    %c0_2 = arith.constant 0 : index
    %c0_3 = arith.constant 0 : index
    %c0_4 = arith.constant 0 : index
    %2 = vector.load %arg3[%c0_2, %c0_3, %c0_4] : memref<9x8x4xbf16, #tpu.memory_space<vmem>>, vector<1x8x4xbf16>
    %3 = vector.shape_cast %2 : vector<1x8x4xbf16> to vector<8x4xbf16>
    %4 = vector.extract_strided_slice %1 {offsets = [0, 0], sizes = [4, 288], strides = [1, 1]} : vector<4x384xbf16> to vector<4x288xbf16>
    %cst = arith.constant dense<0.000000e+00> : vector<8x288xf32>
    %5 = tpu.matmul %3, %4, %cst {dimension_numbers = #tpu.dot_dimension_numbers<[1], [0], [0], [1], [0, 0, 1, 1], [], []>} : vector<8x4xbf16>, vector<4x288xbf16>, vector<8x288xf32> -> vector<8x288xf32>
    %c1 = arith.constant 1 : index
    %c0_5 = arith.constant 0 : index
    %c0_6 = arith.constant 0 : index
    %6 = vector.load %arg3[%c1, %c0_5, %c0_6] : memref<9x8x4xbf16, #tpu.memory_space<vmem>>, vector<1x8x4xbf16>
    %7 = vector.shape_cast %6 : vector<1x8x4xbf16> to vector<8x4xbf16>
    %8 = vector.extract_strided_slice %1 {offsets = [0, 1], sizes = [4, 288], strides = [1, 1]} : vector<4x384xbf16> to vector<4x288xbf16>
    %cst_7 = arith.constant dense<0.000000e+00> : vector<8x288xf32>
    %9 = tpu.matmul %7, %8, %cst_7 {dimension_numbers = #tpu.dot_dimension_numbers<[1], [0], [0], [1], [0, 0, 1, 1], [], []>} : vector<8x4xbf16>, vector<4x288xbf16>, vector<8x288xf32> -> vector<8x288xf32>
    %10 = arith.addf %5, %9 : vector<8x288xf32>
    %c2 = arith.constant 2 : index
    %c0_8 = arith.constant 0 : index
    %c0_9 = arith.constant 0 : index
    %11 = vector.load %arg3[%c2, %c0_8, %c0_9] : memref<9x8x4xbf16, #tpu.memory_space<vmem>>, vector<1x8x4xbf16>
    %12 = vector.shape_cast %11 : vector<1x8x4xbf16> to vector<8x4xbf16>
    %13 = vector.extract_strided_slice %1 {offsets = [0, 2], sizes = [4, 288], strides = [1, 1]} : vector<4x384xbf16> to vector<4x288xbf16>
    %cst_10 = arith.constant dense<0.000000e+00> : vector<8x288xf32>
    %14 = tpu.matmul %12, %13, %cst_10 {dimension_numbers = #tpu.dot_dimension_numbers<[1], [0], [0], [1], [0, 0, 1, 1], [], []>} : vector<8x4xbf16>, vector<4x288xbf16>, vector<8x288xf32> -> vector<8x288xf32>
    %15 = arith.addf %10, %14 : vector<8x288xf32>
    %c3 = arith.constant 3 : index
    %c0_11 = arith.constant 0 : index
    %c0_12 = arith.constant 0 : index
    %16 = vector.load %arg3[%c3, %c0_11, %c0_12] : memref<9x8x4xbf16, #tpu.memory_space<vmem>>, vector<1x8x4xbf16>
    %17 = vector.shape_cast %16 : vector<1x8x4xbf16> to vector<8x4xbf16>
    %18 = vector.extract_strided_slice %1 {offsets = [0, 18], sizes = [4, 288], strides = [1, 1]} : vector<4x384xbf16> to vector<4x288xbf16>
    %cst_13 = arith.constant dense<0.000000e+00> : vector<8x288xf32>
    %19 = tpu.matmul %17, %18, %cst_13 {dimension_numbers = #tpu.dot_dimension_numbers<[1], [0], [0], [1], [0, 0, 1, 1], [], []>} : vector<8x4xbf16>, vector<4x288xbf16>, vector<8x288xf32> -> vector<8x288xf32>
    %20 = arith.addf %15, %19 : vector<8x288xf32>
    %c4 = arith.constant 4 : index
    %c0_14 = arith.constant 0 : index
    %c0_15 = arith.constant 0 : index
    %21 = vector.load %arg3[%c4, %c0_14, %c0_15] : memref<9x8x4xbf16, #tpu.memory_space<vmem>>, vector<1x8x4xbf16>
    %22 = vector.shape_cast %21 : vector<1x8x4xbf16> to vector<8x4xbf16>
    %23 = vector.extract_strided_slice %1 {offsets = [0, 19], sizes = [4, 288], strides = [1, 1]} : vector<4x384xbf16> to vector<4x288xbf16>
    %cst_16 = arith.constant dense<0.000000e+00> : vector<8x288xf32>
    %24 = tpu.matmul %22, %23, %cst_16 {dimension_numbers = #tpu.dot_dimension_numbers<[1], [0], [0], [1], [0, 0, 1, 1], [], []>} : vector<8x4xbf16>, vector<4x288xbf16>, vector<8x288xf32> -> vector<8x288xf32>
    %25 = arith.addf %20, %24 : vector<8x288xf32>
    %c5 = arith.constant 5 : index
    %c0_17 = arith.constant 0 : index
    %c0_18 = arith.constant 0 : index
    %26 = vector.load %arg3[%c5, %c0_17, %c0_18] : memref<9x8x4xbf16, #tpu.memory_space<vmem>>, vector<1x8x4xbf16>
    %27 = vector.shape_cast %26 : vector<1x8x4xbf16> to vector<8x4xbf16>
    %28 = vector.extract_strided_slice %1 {offsets = [0, 20], sizes = [4, 288], strides = [1, 1]} : vector<4x384xbf16> to vector<4x288xbf16>
    %cst_19 = arith.constant dense<0.000000e+00> : vector<8x288xf32>
    %29 = tpu.matmul %27, %28, %cst_19 {dimension_numbers = #tpu.dot_dimension_numbers<[1], [0], [0], [1], [0, 0, 1, 1], [], []>} : vector<8x4xbf16>, vector<4x288xbf16>, vector<8x288xf32> -> vector<8x288xf32>
    %30 = arith.addf %25, %29 : vector<8x288xf32>
    %c6 = arith.constant 6 : index
    %c0_20 = arith.constant 0 : index
    %c0_21 = arith.constant 0 : index
    %31 = vector.load %arg3[%c6, %c0_20, %c0_21] : memref<9x8x4xbf16, #tpu.memory_space<vmem>>, vector<1x8x4xbf16>
    %32 = vector.shape_cast %31 : vector<1x8x4xbf16> to vector<8x4xbf16>
    %33 = vector.extract_strided_slice %1 {offsets = [0, 36], sizes = [4, 288], strides = [1, 1]} : vector<4x384xbf16> to vector<4x288xbf16>
    %cst_22 = arith.constant dense<0.000000e+00> : vector<8x288xf32>
    %34 = tpu.matmul %32, %33, %cst_22 {dimension_numbers = #tpu.dot_dimension_numbers<[1], [0], [0], [1], [0, 0, 1, 1], [], []>} : vector<8x4xbf16>, vector<4x288xbf16>, vector<8x288xf32> -> vector<8x288xf32>
    %35 = arith.addf %30, %34 : vector<8x288xf32>
    %c7 = arith.constant 7 : index
    %c0_23 = arith.constant 0 : index
    %c0_24 = arith.constant 0 : index
    %36 = vector.load %arg3[%c7, %c0_23, %c0_24] : memref<9x8x4xbf16, #tpu.memory_space<vmem>>, vector<1x8x4xbf16>
    %37 = vector.shape_cast %36 : vector<1x8x4xbf16> to vector<8x4xbf16>
    %38 = vector.extract_strided_slice %1 {offsets = [0, 37], sizes = [4, 288], strides = [1, 1]} : vector<4x384xbf16> to vector<4x288xbf16>
    %cst_25 = arith.constant dense<0.000000e+00> : vector<8x288xf32>
    %39 = tpu.matmul %37, %38, %cst_25 {dimension_numbers = #tpu.dot_dimension_numbers<[1], [0], [0], [1], [0, 0, 1, 1], [], []>} : vector<8x4xbf16>, vector<4x288xbf16>, vector<8x288xf32> -> vector<8x288xf32>
    %40 = arith.addf %35, %39 : vector<8x288xf32>
    %c8 = arith.constant 8 : index
    %c0_26 = arith.constant 0 : index
    %c0_27 = arith.constant 0 : index
    %41 = vector.load %arg3[%c8, %c0_26, %c0_27] : memref<9x8x4xbf16, #tpu.memory_space<vmem>>, vector<1x8x4xbf16>
    %42 = vector.shape_cast %41 : vector<1x8x4xbf16> to vector<8x4xbf16>
    %43 = vector.extract_strided_slice %1 {offsets = [0, 38], sizes = [4, 288], strides = [1, 1]} : vector<4x384xbf16> to vector<4x288xbf16>
    %cst_28 = arith.constant dense<0.000000e+00> : vector<8x288xf32>
    %44 = tpu.matmul %42, %43, %cst_28 {dimension_numbers = #tpu.dot_dimension_numbers<[1], [0], [0], [1], [0, 0, 1, 1], [], []>} : vector<8x4xbf16>, vector<4x288xbf16>, vector<8x288xf32> -> vector<8x288xf32>
    %45 = arith.addf %40, %44 : vector<8x288xf32>
    %c0_29 = arith.constant 0 : index
    %c0_30 = arith.constant 0 : index
    %46 = vector.load %arg4[%c0_29, %c0_30] : memref<8x1xf32, #tpu.memory_space<vmem>>, vector<8x1xf32>
    %47 = vector.broadcast %46 : vector<8x1xf32> to vector<8x288xf32>
    %48 = arith.addf %45, %47 : vector<8x288xf32>
    %cst_31 = arith.constant 0.000000e+00 : f32
    %49 = vector.broadcast %cst_31 : f32 to vector<8x288xf32>
    %50 = arith.maximumf %48, %49 : vector<8x288xf32>
    %c0_32 = arith.constant 0 : index
    %c0_33 = arith.constant 0 : index
    %51 = vector.load %arg2[%c0_32, %c0_33] : memref<1x288xf32, #tpu.memory_space<vmem>>, vector<1x288xf32>
    %52 = vector.broadcast %51 : vector<1x288xf32> to vector<8x288xf32>
    %53 = arith.mulf %50, %52 : vector<8x288xf32>
    %cst_34 = arith.constant 0.000000e+00 : bf16
    %54 = vector.broadcast %cst_34 : bf16 to vector<8x19xbf16>
    %c0_35 = arith.constant 0 : index
    %c0_36 = arith.constant 0 : index
    %55 = vector.load %arg10[%c0_35, %c0_36] : memref<8x384xbf16, #tpu.memory_space<vmem>>, vector<8x19xbf16>
    tpu.vector_store %arg10[%c0_35, %c0_36], %54 {strides = array<i32>} : memref<8x384xbf16, #tpu.memory_space<vmem>>, vector<8x19xbf16>,
    %cst_37 = arith.constant 0.000000e+00 : bf16
    %56 = vector.broadcast %cst_37 : bf16 to vector<8x77xbf16>
    %c0_38 = arith.constant 0 : index
    %c307 = arith.constant 307 : index
    %57 = vector.load %arg10[%c0_38, %c307] : memref<8x384xbf16, #tpu.memory_space<vmem>>, vector<8x77xbf16>
    tpu.vector_store %arg10[%c0_38, %c307], %56 {strides = array<i32>} : memref<8x384xbf16, #tpu.memory_space<vmem>>, vector<8x77xbf16>,
    %58 = arith.truncf %53 : vector<8x288xf32> to vector<8x288xbf16>
    %c0_39 = arith.constant 0 : index
    %c19 = arith.constant 19 : index
    %59 = vector.load %arg10[%c0_39, %c19] : memref<8x384xbf16, #tpu.memory_space<vmem>>, vector<8x288xbf16>
    tpu.vector_store %arg10[%c0_39, %c19], %58 {strides = array<i32>} : memref<8x384xbf16, #tpu.memory_space<vmem>>, vector<8x288xbf16>,
    %c0_40 = arith.constant 0 : index
    %c0_41 = arith.constant 0 : index
    %c0_42 = arith.constant 0 : index
    %60 = vector.load %arg5[%c0_40, %c0_41, %c0_42] : memref<9x8x8xbf16, #tpu.memory_space<vmem>>, vector<1x8x8xbf16>
    %61 = vector.shape_cast %60 : vector<1x8x8xbf16> to vector<8x8xbf16>
    %c0_43 = arith.constant 0 : index
    %c0_44 = arith.constant 0 : index
    %62 = vector.load %arg10[%c0_43, %c0_44] : memref<8x384xbf16, #tpu.memory_space<vmem>>, vector<8x288xbf16>
    %cst_45 = arith.constant dense<0.000000e+00> : vector<8x288xf32>
    %63 = tpu.matmul %61, %62, %cst_45 {dimension_numbers = #tpu.dot_dimension_numbers<[1], [0], [0], [1], [0, 0, 1, 1], [], []>} : vector<8x8xbf16>, vector<8x288xbf16>, vector<8x288xf32> -> vector<8x288xf32>
    %c1_46 = arith.constant 1 : index
    %c0_47 = arith.constant 0 : index
    %c0_48 = arith.constant 0 : index
    %64 = vector.load %arg5[%c1_46, %c0_47, %c0_48] : memref<9x8x8xbf16, #tpu.memory_space<vmem>>, vector<1x8x8xbf16>
    %65 = vector.shape_cast %64 : vector<1x8x8xbf16> to vector<8x8xbf16>
    %c0_49 = arith.constant 0 : index
    %c1_50 = arith.constant 1 : index
    %66 = vector.load %arg10[%c0_49, %c1_50] : memref<8x384xbf16, #tpu.memory_space<vmem>>, vector<8x288xbf16>
    %cst_51 = arith.constant dense<0.000000e+00> : vector<8x288xf32>
    %67 = tpu.matmul %65, %66, %cst_51 {dimension_numbers = #tpu.dot_dimension_numbers<[1], [0], [0], [1], [0, 0, 1, 1], [], []>} : vector<8x8xbf16>, vector<8x288xbf16>, vector<8x288xf32> -> vector<8x288xf32>
    %68 = arith.addf %63, %67 : vector<8x288xf32>
    %c2_52 = arith.constant 2 : index
    %c0_53 = arith.constant 0 : index
    %c0_54 = arith.constant 0 : index
    %69 = vector.load %arg5[%c2_52, %c0_53, %c0_54] : memref<9x8x8xbf16, #tpu.memory_space<vmem>>, vector<1x8x8xbf16>
    %70 = vector.shape_cast %69 : vector<1x8x8xbf16> to vector<8x8xbf16>
    %c0_55 = arith.constant 0 : index
    %c2_56 = arith.constant 2 : index
    %71 = vector.load %arg10[%c0_55, %c2_56] : memref<8x384xbf16, #tpu.memory_space<vmem>>, vector<8x288xbf16>
    %cst_57 = arith.constant dense<0.000000e+00> : vector<8x288xf32>
    %72 = tpu.matmul %70, %71, %cst_57 {dimension_numbers = #tpu.dot_dimension_numbers<[1], [0], [0], [1], [0, 0, 1, 1], [], []>} : vector<8x8xbf16>, vector<8x288xbf16>, vector<8x288xf32> -> vector<8x288xf32>
    %73 = arith.addf %68, %72 : vector<8x288xf32>
    %c3_58 = arith.constant 3 : index
    %c0_59 = arith.constant 0 : index
    %c0_60 = arith.constant 0 : index
    %74 = vector.load %arg5[%c3_58, %c0_59, %c0_60] : memref<9x8x8xbf16, #tpu.memory_space<vmem>>, vector<1x8x8xbf16>
    %75 = vector.shape_cast %74 : vector<1x8x8xbf16> to vector<8x8xbf16>
    %c0_61 = arith.constant 0 : index
    %c18 = arith.constant 18 : index
    %76 = vector.load %arg10[%c0_61, %c18] : memref<8x384xbf16, #tpu.memory_space<vmem>>, vector<8x288xbf16>
    %cst_62 = arith.constant dense<0.000000e+00> : vector<8x288xf32>
    %77 = tpu.matmul %75, %76, %cst_62 {dimension_numbers = #tpu.dot_dimension_numbers<[1], [0], [0], [1], [0, 0, 1, 1], [], []>} : vector<8x8xbf16>, vector<8x288xbf16>, vector<8x288xf32> -> vector<8x288xf32>
    %78 = arith.addf %73, %77 : vector<8x288xf32>
    %c4_63 = arith.constant 4 : index
    %c0_64 = arith.constant 0 : index
    %c0_65 = arith.constant 0 : index
    %79 = vector.load %arg5[%c4_63, %c0_64, %c0_65] : memref<9x8x8xbf16, #tpu.memory_space<vmem>>, vector<1x8x8xbf16>
    %80 = vector.shape_cast %79 : vector<1x8x8xbf16> to vector<8x8xbf16>
    %c0_66 = arith.constant 0 : index
    %c19_67 = arith.constant 19 : index
    %81 = vector.load %arg10[%c0_66, %c19_67] : memref<8x384xbf16, #tpu.memory_space<vmem>>, vector<8x288xbf16>
    %cst_68 = arith.constant dense<0.000000e+00> : vector<8x288xf32>
    %82 = tpu.matmul %80, %81, %cst_68 {dimension_numbers = #tpu.dot_dimension_numbers<[1], [0], [0], [1], [0, 0, 1, 1], [], []>} : vector<8x8xbf16>, vector<8x288xbf16>, vector<8x288xf32> -> vector<8x288xf32>
    %83 = arith.addf %78, %82 : vector<8x288xf32>
    %c5_69 = arith.constant 5 : index
    %c0_70 = arith.constant 0 : index
    %c0_71 = arith.constant 0 : index
    %84 = vector.load %arg5[%c5_69, %c0_70, %c0_71] : memref<9x8x8xbf16, #tpu.memory_space<vmem>>, vector<1x8x8xbf16>
    %85 = vector.shape_cast %84 : vector<1x8x8xbf16> to vector<8x8xbf16>
    %c0_72 = arith.constant 0 : index
    %c20 = arith.constant 20 : index
    %86 = vector.load %arg10[%c0_72, %c20] : memref<8x384xbf16, #tpu.memory_space<vmem>>, vector<8x288xbf16>
    %cst_73 = arith.constant dense<0.000000e+00> : vector<8x288xf32>
    %87 = tpu.matmul %85, %86, %cst_73 {dimension_numbers = #tpu.dot_dimension_numbers<[1], [0], [0], [1], [0, 0, 1, 1], [], []>} : vector<8x8xbf16>, vector<8x288xbf16>, vector<8x288xf32> -> vector<8x288xf32>
    %88 = arith.addf %83, %87 : vector<8x288xf32>
    %c6_74 = arith.constant 6 : index
    %c0_75 = arith.constant 0 : index
    %c0_76 = arith.constant 0 : index
    %89 = vector.load %arg5[%c6_74, %c0_75, %c0_76] : memref<9x8x8xbf16, #tpu.memory_space<vmem>>, vector<1x8x8xbf16>
    %90 = vector.shape_cast %89 : vector<1x8x8xbf16> to vector<8x8xbf16>
    %c0_77 = arith.constant 0 : index
    %c36 = arith.constant 36 : index
    %91 = vector.load %arg10[%c0_77, %c36] : memref<8x384xbf16, #tpu.memory_space<vmem>>, vector<8x288xbf16>
    %cst_78 = arith.constant dense<0.000000e+00> : vector<8x288xf32>
    %92 = tpu.matmul %90, %91, %cst_78 {dimension_numbers = #tpu.dot_dimension_numbers<[1], [0], [0], [1], [0, 0, 1, 1], [], []>} : vector<8x8xbf16>, vector<8x288xbf16>, vector<8x288xf32> -> vector<8x288xf32>
    %93 = arith.addf %88, %92 : vector<8x288xf32>
    %c7_79 = arith.constant 7 : index
    %c0_80 = arith.constant 0 : index
    %c0_81 = arith.constant 0 : index
    %94 = vector.load %arg5[%c7_79, %c0_80, %c0_81] : memref<9x8x8xbf16, #tpu.memory_space<vmem>>, vector<1x8x8xbf16>
    %95 = vector.shape_cast %94 : vector<1x8x8xbf16> to vector<8x8xbf16>
    %c0_82 = arith.constant 0 : index
    %c37 = arith.constant 37 : index
    %96 = vector.load %arg10[%c0_82, %c37] : memref<8x384xbf16, #tpu.memory_space<vmem>>, vector<8x288xbf16>
    %cst_83 = arith.constant dense<0.000000e+00> : vector<8x288xf32>
    %97 = tpu.matmul %95, %96, %cst_83 {dimension_numbers = #tpu.dot_dimension_numbers<[1], [0], [0], [1], [0, 0, 1, 1], [], []>} : vector<8x8xbf16>, vector<8x288xbf16>, vector<8x288xf32> -> vector<8x288xf32>
    %98 = arith.addf %93, %97 : vector<8x288xf32>
    %c8_84 = arith.constant 8 : index
    %c0_85 = arith.constant 0 : index
    %c0_86 = arith.constant 0 : index
    %99 = vector.load %arg5[%c8_84, %c0_85, %c0_86] : memref<9x8x8xbf16, #tpu.memory_space<vmem>>, vector<1x8x8xbf16>
    %100 = vector.shape_cast %99 : vector<1x8x8xbf16> to vector<8x8xbf16>
    %c0_87 = arith.constant 0 : index
    %c38 = arith.constant 38 : index
    %101 = vector.load %arg10[%c0_87, %c38] : memref<8x384xbf16, #tpu.memory_space<vmem>>, vector<8x288xbf16>
    %cst_88 = arith.constant dense<0.000000e+00> : vector<8x288xf32>
    %102 = tpu.matmul %100, %101, %cst_88 {dimension_numbers = #tpu.dot_dimension_numbers<[1], [0], [0], [1], [0, 0, 1, 1], [], []>} : vector<8x8xbf16>, vector<8x288xbf16>, vector<8x288xf32> -> vector<8x288xf32>
    %103 = arith.addf %98, %102 : vector<8x288xf32>
    %104 = vector.extract_strided_slice %1 {offsets = [0, 19], sizes = [4, 288], strides = [1, 1]} : vector<4x384xbf16> to vector<4x288xbf16>
    %c0_89 = arith.constant 0 : index
    %c0_90 = arith.constant 0 : index
    %105 = vector.load %arg7[%c0_89, %c0_90] : memref<8x4xbf16, #tpu.memory_space<vmem>>, vector<8x4xbf16>
    %cst_91 = arith.constant dense<0.000000e+00> : vector<8x288xf32>
    %106 = tpu.matmul %105, %104, %cst_91 {dimension_numbers = #tpu.dot_dimension_numbers<[1], [0], [0], [1], [0, 0, 1, 1], [], []>} : vector<8x4xbf16>, vector<4x288xbf16>, vector<8x288xf32> -> vector<8x288xf32>
    %c0_92 = arith.constant 0 : index
    %c0_93 = arith.constant 0 : index
    %107 = vector.load %arg8[%c0_92, %c0_93] : memref<8x1xf32, #tpu.memory_space<vmem>>, vector<8x1xf32>
    %108 = vector.broadcast %107 : vector<8x1xf32> to vector<8x288xf32>
    %109 = arith.addf %106, %108 : vector<8x288xf32>
    %c0_94 = arith.constant 0 : index
    %c0_95 = arith.constant 0 : index
    %110 = vector.load %arg6[%c0_94, %c0_95] : memref<8x1xf32, #tpu.memory_space<vmem>>, vector<8x1xf32>
    %111 = vector.broadcast %110 : vector<8x1xf32> to vector<8x288xf32>
    %112 = arith.addf %103, %111 : vector<8x288xf32>
    %113 = arith.addf %112, %109 : vector<8x288xf32>
    %cst_96 = arith.constant 0.000000e+00 : f32
    %114 = vector.broadcast %cst_96 : f32 to vector<8x288xf32>
    %115 = arith.maximumf %113, %114 : vector<8x288xf32>
    %c0_97 = arith.constant 0 : index
    %c0_98 = arith.constant 0 : index
    %c0_99 = arith.constant 0 : index
    %116 = vector.load %arg9[%c0_97, %c0_98, %c0_99] : memref<1x8x288xf32, #tpu.memory_space<vmem>>, vector<1x8x288xf32>
    %117 = vector.shape_cast %116 : vector<1x8x288xf32> to vector<8x288xf32>
    %118 = vector.shape_cast %115 : vector<8x288xf32> to vector<1x8x288xf32>
    tpu.vector_store %arg9[%c0_97, %c0_98, %c0_99], %118 {strides = array<i32>} : memref<1x8x288xf32, #tpu.memory_space<vmem>>, vector<1x8x288xf32>,
    return
  }
  func.func @transform_0(%arg0: i32) -> (i32, i32, i32) {
    %c0_i32 = arith.constant 0 : i32
    %c0_i32_0 = arith.constant 0 : i32
    %c0_i32_1 = arith.constant 0 : i32
    return %arg0, %c0_i32, %c0_i32_0 : i32, i32, i32
  }
  func.func @transform_1(%arg0: i32) -> (i32, i32) {
    %c0_i32 = arith.constant 0 : i32
    %c0_i32_0 = arith.constant 0 : i32
    %c0_i32_1 = arith.constant 0 : i32
    return %c0_i32, %c0_i32_0 : i32, i32
  }
  func.func @transform_2(%arg0: i32) -> (i32, i32, i32) {
    %c0_i32 = arith.constant 0 : i32
    %c0_i32_0 = arith.constant 0 : i32
    %c0_i32_1 = arith.constant 0 : i32
    %c0_i32_2 = arith.constant 0 : i32
    return %c0_i32, %c0_i32_0, %c0_i32_1 : i32, i32, i32
  }
  func.func @transform_3(%arg0: i32) -> (i32, i32) {
    %c0_i32 = arith.constant 0 : i32
    %c0_i32_0 = arith.constant 0 : i32
    %c0_i32_1 = arith.constant 0 : i32
    return %c0_i32, %c0_i32_0 : i32, i32
  }
  func.func @transform_4(%arg0: i32) -> (i32, i32, i32) {
    %c0_i32 = arith.constant 0 : i32
    %c0_i32_0 = arith.constant 0 : i32
    %c0_i32_1 = arith.constant 0 : i32
    %c0_i32_2 = arith.constant 0 : i32
    return %c0_i32, %c0_i32_0, %c0_i32_1 : i32, i32, i32
  }
  func.func @transform_5(%arg0: i32) -> (i32, i32) {
    %c0_i32 = arith.constant 0 : i32
    %c0_i32_0 = arith.constant 0 : i32
    %c0_i32_1 = arith.constant 0 : i32
    return %c0_i32, %c0_i32_0 : i32, i32
  }
  func.func @transform_6(%arg0: i32) -> (i32, i32) {
    %c0_i32 = arith.constant 0 : i32
    %c0_i32_0 = arith.constant 0 : i32
    %c0_i32_1 = arith.constant 0 : i32
    return %c0_i32, %c0_i32_0 : i32, i32
  }
  func.func @transform_7(%arg0: i32) -> (i32, i32) {
    %c0_i32 = arith.constant 0 : i32
    %c0_i32_0 = arith.constant 0 : i32
    %c0_i32_1 = arith.constant 0 : i32
    return %c0_i32, %c0_i32_0 : i32, i32
  }
  func.func @transform_8(%arg0: i32) -> (i32, i32, i32) {
    %c0_i32 = arith.constant 0 : i32
    %c0_i32_0 = arith.constant 0 : i32
    %c0_i32_1 = arith.constant 0 : i32
    return %arg0, %c0_i32, %c0_i32_0 : i32, i32, i32
  }
}

</mosaic_0001>

<llo_original>
// kernel: tpu_custom_call.1
$region0: #{tpu_custom_call.1}
  #allocation0 [shape = 'u32[]', space=smem, size = 0x4, offset = 0x4, fixed_abs, tag = 'smem constant byte address 0x4 - core index']
  #allocation1 [shape = 'u32[144,128]{1,0:T(1,128)}', space=vmem, size = 0x12000, scoped, tag = 'internal scratch']
  #allocation2 [shape = 'bf16[8,384]{1,0:T(8,128)(2,1)}', space=vmem, size = 0x1800, scoped, tag = 'scratch operand']
  %s0 = inlined_call_operand.vmem [shape: bf16[2,4,384], index: 0, kind: input, shape index: {}]
  %s1 = inlined_call_operand.vmem [shape: f32[1,288], index: 1, kind: input, shape index: {}]
  %s2 = inlined_call_operand.vmem [shape: bf16[9,8,4], index: 2, kind: input, shape index: {}]
  %s3 = inlined_call_operand.vmem [shape: f32[8,1], index: 3, kind: input, shape index: {}]
  %s4 = inlined_call_operand.vmem [shape: bf16[9,8,8], index: 4, kind: input, shape index: {}]
  %s5 = inlined_call_operand.vmem [shape: f32[8,1], index: 5, kind: input, shape index: {}]
  %s6 = inlined_call_operand.vmem [shape: bf16[8,4], index: 6, kind: input, shape index: {}]
  %s7 = inlined_call_operand.vmem [shape: f32[8,1], index: 7, kind: input, shape index: {}]
  %s8 = inlined_call_operand.hbm [shape: f32[2,8,288], index: 8, kind: output, shape index: {}]
  %s9 = sld [smem:[#allocation0]]
  $region65: #{tpu_custom_call.1} parent=0
    _
  %s11 = ssub.s32 1, %s9
  %s12 = scalar_select 0, %s11, %s9
  $region1: #{tpu_custom_call.1} parent=0
    #allocation3 [shape = 'u8[24576]{0}', space=vmem, size = 0x6000, scoped, tag = 'output window, operand 0']
    #allocation4 [shape = 's32[2]{0}', space=sflag, size = 0x8, scoped, tag = 'scoped memory for tpu_custom_call.1']
    %13 = vsyncpa [#allocation4], 0
    %s14 = scalar_lea.sflag [#allocation4], 1
    %15 = vsyncpa %s14, 0
    loop: start=0, step=1, limit=4
    $region2: #{tpu_custom_call.1} parent=1 // loop_pre_header
      _
    $region3: #{tpu_custom_call.1} parent=1 // loop_header
      %s17 = sphi 0, %s21
      %p18 = scmp.ge.s32.totalorder %s17, 4
      %s27 = sphi 0, %s29
      %s30 = sphi 0, %s27
      %s31 = sphi 0, %s30
      %s47 = sphi 0, %s31
      %s51 = sphi 0, %s51
      %s53 = sphi 0, %s51
      %s54 = sphi 0, %s53
      %s68 = sphi 0, %s54
      %s72 = sphi 0, %s72
      %s74 = sphi 0, %s72
      %s75 = sphi 0, %s74
      %s89 = sphi 0, %s75
      %s93 = sphi 0, %s93
      %s95 = sphi 0, %s93
      %s96 = sphi 0, %s95
      %s110 = sphi 0, %s96
      %s114 = sphi 0, %s114
      %s116 = sphi 0, %s114
      %s117 = sphi 0, %s116
      %s131 = sphi 0, %s117
      %s135 = sphi 0, %s135
      %s137 = sphi 0, %s135
      %s138 = sphi 0, %s137
      %s152 = sphi 0, %s138
      %s156 = sphi 0, %s156
      %s158 = sphi 0, %s156
      %s159 = sphi 0, %s158
      %s173 = sphi 0, %s159
      %s177 = sphi 0, %s177
      %s179 = sphi 0, %s177
      %s180 = sphi 0, %s179
      %s194 = sphi 0, %s180
      %s200 = sphi 0, %s202
      %s203 = sphi 0, %s200
      %s204 = sphi 0, %s203
      %s220 = sphi 0, %s204
    $region4: #{tpu_custom_call.1} parent=1 // loop_header_branch
      %20 = sbr.rel (%p18) target = $region8
    $region5: #{tpu_custom_call.1} parent=1 // loop_body
      %s22 = ssub.s32 %s17, 1
      %s23 = ssub.s32 %s17, 2
      %s24 = sadd.s32 %s17, 1
      %s25 = ssub.s32 %s17, %s24
      %p26 = scmp.eq.s32.totalorder %s25, 0
      %s28 = sadd.s32 %s27, 1
      %s29 = scalar_select %p26, %s27, %s28
      %p32 = pneg %p26
      %p33 = scmp.eq.s32.totalorder %s17, 1
      %p34 = por %p32, %p33
      %p35 = scmp.ne.s32.totalorder %s27, %s30
      %p36 = scmp.eq.s32.totalorder %s17, 0
      %p37 = por %p35, %p36
      %p38 = scmp.ne.s32.totalorder %s27, %s30
      %p39 = scmp.eq.s32.totalorder %s22, 1
      %p40 = por %p38, %p39
      %p41 = scmp.ne.s32.totalorder %s30, %s31
      %p42 = scmp.eq.s32.totalorder %s22, 0
      %p43 = por %p41, %p42
      %p44 = scmp.ne.s32.totalorder %s30, %s31
      %p45 = scmp.eq.s32.totalorder %s23, 1
      %p46 = por %p44, %p45
      %p48 = scmp.ne.s32.totalorder %s31, %s47
      %p49 = scmp.eq.s32.totalorder %s23, 0
      %p50 = por %p48, %p49
      %s52 = sadd.s32 %s51, 1
      %p55 = scmp.eq.s32.totalorder %s17, 1
      %p56 = scmp.ne.s32.totalorder %s51, %s53
      %p57 = scmp.eq.s32.totalorder %s17, 0
      %p58 = por %p56, %p57
      %p59 = scmp.ne.s32.totalorder %s51, %s53
      %p60 = scmp.eq.s32.totalorder %s22, 1
      %p61 = por %p59, %p60
      %p62 = scmp.ne.s32.totalorder %s53, %s54
      %p63 = scmp.eq.s32.totalorder %s22, 0
      %p64 = por %p62, %p63
      %p65 = scmp.ne.s32.totalorder %s53, %s54
      %p66 = scmp.eq.s32.totalorder %s23, 1
      %p67 = por %p65, %p66
      %p69 = scmp.ne.s32.totalorder %s54, %s68
      %p70 = scmp.eq.s32.totalorder %s23, 0
      %p71 = por %p69, %p70
      %s73 = sadd.s32 %s72, 1
      %p76 = scmp.eq.s32.totalorder %s17, 1
      %p77 = scmp.ne.s32.totalorder %s72, %s74
      %p78 = scmp.eq.s32.totalorder %s17, 0
      %p79 = por %p77, %p78
      %p80 = scmp.ne.s32.totalorder %s72, %s74
      %p81 = scmp.eq.s32.totalorder %s22, 1
      %p82 = por %p80, %p81
      %p83 = scmp.ne.s32.totalorder %s74, %s75
      %p84 = scmp.eq.s32.totalorder %s22, 0
      %p85 = por %p83, %p84
      %p86 = scmp.ne.s32.totalorder %s74, %s75
      %p87 = scmp.eq.s32.totalorder %s23, 1
      %p88 = por %p86, %p87
      %p90 = scmp.ne.s32.totalorder %s75, %s89
      %p91 = scmp.eq.s32.totalorder %s23, 0
      %p92 = por %p90, %p91
      %s94 = sadd.s32 %s93, 1
      %p97 = scmp.eq.s32.totalorder %s17, 1
      %p98 = scmp.ne.s32.totalorder %s93, %s95
      %p99 = scmp.eq.s32.totalorder %s17, 0
      %p100 = por %p98, %p99
      %p101 = scmp.ne.s32.totalorder %s93, %s95
      %p102 = scmp.eq.s32.totalorder %s22, 1
      %p103 = por %p101, %p102
      %p104 = scmp.ne.s32.totalorder %s95, %s96
      %p105 = scmp.eq.s32.totalorder %s22, 0
      %p106 = por %p104, %p105
      %p107 = scmp.ne.s32.totalorder %s95, %s96
      %p108 = scmp.eq.s32.totalorder %s23, 1
      %p109 = por %p107, %p108
      %p111 = scmp.ne.s32.totalorder %s96, %s110
      %p112 = scmp.eq.s32.totalorder %s23, 0
      %p113 = por %p111, %p112
      %s115 = sadd.s32 %s114, 1
      %p118 = scmp.eq.s32.totalorder %s17, 1
      %p119 = scmp.ne.s32.totalorder %s114, %s116
      %p120 = scmp.eq.s32.totalorder %s17, 0
      %p121 = por %p119, %p120
      %p122 = scmp.ne.s32.totalorder %s114, %s116
      %p123 = scmp.eq.s32.totalorder %s22, 1
      %p124 = por %p122, %p123
      %p125 = scmp.ne.s32.totalorder %s116, %s117
      %p126 = scmp.eq.s32.totalorder %s22, 0
      %p127 = por %p125, %p126
      %p128 = scmp.ne.s32.totalorder %s116, %s117
      %p129 = scmp.eq.s32.totalorder %s23, 1
      %p130 = por %p128, %p129
      %p132 = scmp.ne.s32.totalorder %s117, %s131
      %p133 = scmp.eq.s32.totalorder %s23, 0
      %p134 = por %p132, %p133
      %s136 = sadd.s32 %s135, 1
      %p139 = scmp.eq.s32.totalorder %s17, 1
      %p140 = scmp.ne.s32.totalorder %s135, %s137
      %p141 = scmp.eq.s32.totalorder %s17, 0
      %p142 = por %p140, %p141
      %p143 = scmp.ne.s32.totalorder %s135, %s137
      %p144 = scmp.eq.s32.totalorder %s22, 1
      %p145 = por %p143, %p144
      %p146 = scmp.ne.s32.totalorder %s137, %s138
      %p147 = scmp.eq.s32.totalorder %s22, 0
      %p148 = por %p146, %p147
      %p149 = scmp.ne.s32.totalorder %s137, %s138
      %p150 = scmp.eq.s32.totalorder %s23, 1
      %p151 = por %p149, %p150
      %p153 = scmp.ne.s32.totalorder %s138, %s152
      %p154 = scmp.eq.s32.totalorder %s23, 0
      %p155 = por %p153, %p154
      %s157 = sadd.s32 %s156, 1
      %p160 = scmp.eq.s32.totalorder %s17, 1
      %p161 = scmp.ne.s32.totalorder %s156, %s158
      %p162 = scmp.eq.s32.totalorder %s17, 0
      %p163 = por %p161, %p162
      %p164 = scmp.ne.s32.totalorder %s156, %s158
      %p165 = scmp.eq.s32.totalorder %s22, 1
      %p166 = por %p164, %p165
      %p167 = scmp.ne.s32.totalorder %s158, %s159
      %p168 = scmp.eq.s32.totalorder %s22, 0
      %p169 = por %p167, %p168
      %p170 = scmp.ne.s32.totalorder %s158, %s159
      %p171 = scmp.eq.s32.totalorder %s23, 1
      %p172 = por %p170, %p171
      %p174 = scmp.ne.s32.totalorder %s159, %s173
      %p175 = scmp.eq.s32.totalorder %s23, 0
      %p176 = por %p174, %p175
      %s178 = sadd.s32 %s177, 1
      %p181 = scmp.eq.s32.totalorder %s17, 1
      %p182 = scmp.ne.s32.totalorder %s177, %s179
      %p183 = scmp.eq.s32.totalorder %s17, 0
      %p184 = por %p182, %p183
      %p185 = scmp.ne.s32.totalorder %s177, %s179
      %p186 = scmp.eq.s32.totalorder %s22, 1
      %p187 = por %p185, %p186
      %p188 = scmp.ne.s32.totalorder %s179, %s180
      %p189 = scmp.eq.s32.totalorder %s22, 0
      %p190 = por %p188, %p189
      %p191 = scmp.ne.s32.totalorder %s179, %s180
      %p192 = scmp.eq.s32.totalorder %s23, 1
      %p193 = por %p191, %p192
      %p195 = scmp.ne.s32.totalorder %s180, %s194
      %p196 = scmp.eq.s32.totalorder %s23, 0
      %p197 = por %p195, %p196
      %s198 = ssub.s32 %s17, %s24
      %p199 = scmp.eq.s32.totalorder %s198, 0
      %s201 = sadd.s32 %s200, 1
      %s202 = scalar_select %p199, %s200, %s201
      %p205 = pneg %p199
      %p206 = scmp.eq.s32.totalorder %s17, 1
      %p207 = por %p205, %p206
      %p208 = scmp.ne.s32.totalorder %s200, %s203
      %p209 = scmp.eq.s32.totalorder %s17, 0
      %p210 = por %p208, %p209
      %p211 = scmp.ne.s32.totalorder %s200, %s203
      %p212 = scmp.eq.s32.totalorder %s22, 1
      %p213 = por %p211, %p212
      %p214 = scmp.ne.s32.totalorder %s203, %s204
      %p215 = scmp.eq.s32.totalorder %s22, 0
      %p216 = por %p214, %p215
      %p217 = scmp.ne.s32.totalorder %s203, %s204
      %p218 = scmp.eq.s32.totalorder %s23, 1
      %p219 = por %p217, %p218
      %p221 = scmp.ne.s32.totalorder %s204, %s220
      %p222 = scmp.eq.s32.totalorder %s23, 0
      %p223 = por %p221, %p222
      %p224 = scmp.le.s32.totalorder 1, %s17
      %p225 = scmp.lt.s32.totalorder %s17, 3
      %p226 = pnand %p224, %p225
      %p227 = pneg %p226
      // Predicated region
      $region9: #{tpu_custom_call.1} parent=5 // pred_check
        _
      $region10: #{tpu_custom_call.1} parent=5 // pred_check_branch
        %229 = sbr.rel (%p226) target = $region12
      $region11: #{tpu_custom_call.1} parent=5 // pred_region
        %s230 = ssub.s32 %s17, 1
        // Predicated region
        $region13: #{tpu_custom_call.1} parent=11 // pred_check
          %p231 = pneg %p64
        $region14: #{tpu_custom_call.1} parent=11 // pred_check_branch
          %233 = sbr.rel (%p231) target = $region16
        $region15: #{tpu_custom_call.1} parent=11 // pred_region
          _
        $region16: #{tpu_custom_call.1} parent=11 // pred_fallthru
          _
        // Predicated region
        $region17: #{tpu_custom_call.1} parent=11 // pred_check
          %p234 = pneg %p85
        $region18: #{tpu_custom_call.1} parent=11 // pred_check_branch
          %236 = sbr.rel (%p234) target = $region20
        $region19: #{tpu_custom_call.1} parent=11 // pred_region
          _
        $region20: #{tpu_custom_call.1} parent=11 // pred_fallthru
          _
        // Predicated region
        $region21: #{tpu_custom_call.1} parent=11 // pred_check
          %p237 = pneg %p106
        $region22: #{tpu_custom_call.1} parent=11 // pred_check_branch
          %239 = sbr.rel (%p237) target = $region24
        $region23: #{tpu_custom_call.1} parent=11 // pred_region
          _
        $region24: #{tpu_custom_call.1} parent=11 // pred_fallthru
          _
        // Predicated region
        $region25: #{tpu_custom_call.1} parent=11 // pred_check
          %p240 = pneg %p127
        $region26: #{tpu_custom_call.1} parent=11 // pred_check_branch
          %242 = sbr.rel (%p240) target = $region28
        $region27: #{tpu_custom_call.1} parent=11 // pred_region
          _
        $region28: #{tpu_custom_call.1} parent=11 // pred_fallthru
          _
        // Predicated region
        $region29: #{tpu_custom_call.1} parent=11 // pred_check
          %p243 = pneg %p148
        $region30: #{tpu_custom_call.1} parent=11 // pred_check_branch
          %245 = sbr.rel (%p243) target = $region32
        $region31: #{tpu_custom_call.1} parent=11 // pred_region
          _
        $region32: #{tpu_custom_call.1} parent=11 // pred_fallthru
          _
        // Predicated region
        $region33: #{tpu_custom_call.1} parent=11 // pred_check
          %p246 = pneg %p169
        $region34: #{tpu_custom_call.1} parent=11 // pred_check_branch
          %248 = sbr.rel (%p246) target = $region36
        $region35: #{tpu_custom_call.1} parent=11 // pred_region
          _
        $region36: #{tpu_custom_call.1} parent=11 // pred_fallthru
          _
        // Predicated region
        $region37: #{tpu_custom_call.1} parent=11 // pred_check
          %p249 = pneg %p190
        $region38: #{tpu_custom_call.1} parent=11 // pred_check_branch
          %251 = sbr.rel (%p249) target = $region40
        $region39: #{tpu_custom_call.1} parent=11 // pred_region
          _
        $region40: #{tpu_custom_call.1} parent=11 // pred_fallthru
          _
      $region12: #{tpu_custom_call.1} parent=5 // pred_fallthru
        _
      %p252 = scmp.lt.s32.totalorder %s17, 2
      // Predicated region
      $region41: #{tpu_custom_call.1} parent=5 // pred_check
        %p253 = pneg %p252
      $region42: #{tpu_custom_call.1} parent=5 // pred_check_branch
        %255 = sbr.rel (%p253) target = $region44
      $region43: #{tpu_custom_call.1} parent=5 // pred_region
        // Predicated region
        $region45: #{tpu_custom_call.1} parent=43 // pred_check
          %p256 = pneg %p37
        $region46: #{tpu_custom_call.1} parent=43 // pred_check_branch
          %258 = sbr.rel (%p256) target = $region48
        $region47: #{tpu_custom_call.1} parent=43 // pred_region
          %p259 = scmp.lt.s32.totalorder %s17, 1
          %s260 = scalar_select %p259, %s17, 1
          %s261 = smul.addr %s260, 3
          %s262 = smul.addr %s261, 2
          %s263 = scalar_lea.vmem %s0, %s262
        $region48: #{tpu_custom_call.1} parent=43 // pred_fallthru
          _
      $region44: #{tpu_custom_call.1} parent=5 // pred_fallthru
        _
      %p264 = scmp.le.s32.totalorder 1, %s17
      %p265 = scmp.lt.s32.totalorder %s17, 3
      %p266 = pnand %p264, %p265
      %p267 = pneg %p266
      // Predicated region
      $region49: #{tpu_custom_call.1} parent=5 // pred_check
        _
      $region50: #{tpu_custom_call.1} parent=5 // pred_check_branch
        %269 = sbr.rel (%p266) target = $region52
      $region51: #{tpu_custom_call.1} parent=5 // pred_region
        %s270 = ssub.s32 %s17, 1
        %p271 = scmp.lt.s32.totalorder %s22, 1
        %s272 = scalar_select %p271, %s22, 1
        %s273 = smul.addr %s272, 3
        %s274 = smul.addr %s273, 2
        %s275 = scalar_lea.vmem %s0, %s274
        %p276 = pneg %p43
        %p277 = pneg %p40
        %p278 = pneg %p64
        %p279 = pneg %p61
        %p280 = pneg %p85
        %p281 = pneg %p82
        %p282 = pneg %p106
        %p283 = pneg %p103
        %p284 = pneg %p127
        %p285 = pneg %p124
        %p286 = pneg %p148
        %p287 = pneg %p145
        %p288 = pneg %p169
        %p289 = pneg %p166
        %p290 = pneg %p190
        %p291 = pneg %p187
        %p292 = pneg %p216
        %p293 = pneg %p213
        %s294 = sand.u32 %s203, 1
        %s295 = scalar_lea.sflag [#allocation4], %s294
        %s296 = sand.u32 %s203, 1
        %s297 = smul.addr %s296, 24
        %s298 = scalar_lea.vmem [#allocation3], %s297
        %p299 = scmp.lt.s32.totalorder %s22, 1
        %s300 = scalar_select %p299, %s22, 1
        %s301 = smul.addr %s300, 3
        %s302 = smul.addr %s301, 2
        %s303 = scalar_lea.vmem %s0, %s302
        %v305 = vld [vmem:[%s303] sm:$0x3f]
        %v306 = vld [vmem:[%s2] sm:$0xf]
        %s307 = scalar_lea.vmem %s2, 4
        %v308 = vld [vmem:[%s307] sm:$0xf]
        %v310 = vcombine.high %v305, %v305
        %v312 = vunpack.c.l.s4 1983009808
        %v313 = vunpack.c.0.s8 %v312
        %v314 = vlaneseq
        %v315 = vshrl.u32 %v314, 7
        %v316 = vsub.s32 %v313, %v315
        %v317 = vrot.slane %v305, %v316
        %v319 = vunpack.c.l.s4 1983009808
        %v320 = vunpack.c.0.s8 %v319
        %v321 = vlaneseq
        %v322 = vshrl.u32 %v321, 7
        %v323 = vsub.s32 %v320, %v322
        %v324 = vrot.slane %v310, %v323
        %v325 = vcombine.high %v317, %v317
        %326 = vrot.lane.b32.xlu0 %v317, 127
        %v327 = vpop.permute.xlu0 %326
        %328 = vrot.lane.b32.xlu0 %v325, 127
        %v329 = vpop.permute.xlu0 %328
        %330 = vrot.lane.b32.xlu0 %v324, 127
        %v331 = vpop.permute.xlu0 %330
        %vm332 = vcmask 1039360
        %v333 = vsel %vm332, %v327, %v329
        %v334 = vsel %vm332, %v329, %v331
        %vm335 = vcmask 31744
        %v337 = vsel %vm335, %v308, 0
        %vm339 = vcmask 1041408
        %v341 = vsel %vm339, %v333, 0
        %v344 = vsel %vm339, %v334, 0
        %v347 = vsel %vm339, %v331, 0
        %349 = vmatprep.subr.bf16.mxu0 0
        %350 = vmatpush1.bf16.msra.mxu0 0
        %351 = vmatprep.subr.bf16.mxu0 0
        %352 = vmatpush1.bf16.msra.mxu0 0
        %353 = vmatprep.subr.bf16.mxu0 0
        %354 = vmatpush1.bf16.msra.mxu0 0
        %355 = vmatprep.subr.bf16.mxu0 0
        %356 = vmatpush1.bf16.msra.mxu0 0
        %357 = vmatprep.subr.bf16.mxu0 0
        %358 = vmatpush1.bf16.msra.mxu0 0
        %359 = vmatprep.subr.bf16.mxu0 0
        %360 = vmatpush1.bf16.msra.mxu0 0
        %361 = vmatprep.subr.bf16.mxu0 0
        %362 = vmatpush1.bf16.msra.mxu0 0
        %363 = vmatprep.subr.bf16.mxu0 %v344
        %364 = vmatpush1.bf16.msra.mxu0 %v341
        %365 = vmatprep.subr.bf16.mxu0 0
        %366 = vmatpush2.bf16.msra.mxu0 0
        %367 = vmatprep.subr.bf16.mxu0 0
        %368 = vmatpush2.bf16.msra.mxu0 0
        %369 = vmatprep.subr.bf16.mxu0 0
        %370 = vmatpush2.bf16.msra.mxu0 0
        %371 = vmatprep.subr.bf16.mxu0 0
        %372 = vmatpush2.bf16.msra.mxu0 0
        %373 = vmatprep.subr.bf16.mxu0 0
        %374 = vmatpush2.bf16.msra.mxu0 0
        %375 = vmatprep.subr.bf16.mxu0 0
        %376 = vmatpush2.bf16.msra.mxu0 0
        %377 = vmatprep.subr.bf16.mxu0 0
        %378 = vmatpush2.bf16.msra.mxu0 0
        %379 = vmatprep.subr.bf16.mxu0 0
        %380 = vmatpush2.bf16.msra.mxu0 0
        %381 = vmatprep.mubr.bf16.mxu0 0
        %382 = vmatmul.mubr.bf16.gmra.mxu0 %v337
        %v383 = vpop.f32.mrf.mxu0
        %v384 = vadd.f32 0.0, %v383
        %v385 = vpop.f32.mrf.mxu0
        %v386 = vadd.f32 0.0, %v385
        %v387 = vpop.f32.mrf.mxu0
        %v388 = vpop.f32.mrf.mxu0
        %389 = vdwg.mxu0
        %390 = vmatprep.subr.bf16.mxu0 0
        %391 = vmatpush1.bf16.msra.mxu0 0
        %392 = vmatprep.subr.bf16.mxu0 0
        %393 = vmatpush1.bf16.msra.mxu0 0
        %394 = vmatprep.subr.bf16.mxu0 0
        %395 = vmatpush1.bf16.msra.mxu0 0
        %396 = vmatprep.subr.bf16.mxu0 0
        %397 = vmatpush1.bf16.msra.mxu0 0
        %398 = vmatprep.subr.bf16.mxu0 0
        %399 = vmatpush1.bf16.msra.mxu0 0
        %400 = vmatprep.subr.bf16.mxu0 0
        %401 = vmatpush1.bf16.msra.mxu0 0
        %402 = vmatprep.subr.bf16.mxu0 0
        %403 = vmatpush1.bf16.msra.mxu0 0
        %404 = vmatprep.subr.bf16.mxu0 0
        %405 = vmatpush1.bf16.msra.mxu0 %v347
        %406 = vmatprep.subr.bf16.mxu0 0
        %407 = vmatpush2.bf16.msra.mxu0 0
        %408 = vmatprep.subr.bf16.mxu0 0
        %409 = vmatpush2.bf16.msra.mxu0 0
        %410 = vmatprep.subr.bf16.mxu0 0
        %411 = vmatpush2.bf16.msra.mxu0 0
        %412 = vmatprep.subr.bf16.mxu0 0
        %413 = vmatpush2.bf16.msra.mxu0 0
        %414 = vmatprep.subr.bf16.mxu0 0
        %415 = vmatpush2.bf16.msra.mxu0 0
        %416 = vmatprep.subr.bf16.mxu0 0
        %417 = vmatpush2.bf16.msra.mxu0 0
        %418 = vmatprep.subr.bf16.mxu0 0
        %419 = vmatpush2.bf16.msra.mxu0 0
        %420 = vmatprep.subr.bf16.mxu0 0
        %421 = vmatpush2.bf16.msra.mxu0 0
        %422 = vmatprep.mubr.bf16.mxu0 0
        %423 = vmatmul.mubr.bf16.gmra.mxu0 %v337
        %v424 = vpop.f32.mrf.mxu0
        %v425 = vadd.f32 0.0, %v424
        %v426 = vpop.f32.mrf.mxu0
        %v427 = vpop.f32.mrf.mxu0
        %v428 = vpop.f32.mrf.mxu0
        %429 = vdwg.mxu0
        %v431 = vsel %vm335, %v306, 0
        %v434 = vsel %vm339, %v317, 0
        %v437 = vsel %vm339, %v325, 0
        %v440 = vsel %vm339, %v324, 0
        %442 = vmatprep.subr.bf16.mxu0 0
        %443 = vmatpush1.bf16.msra.mxu0 0
        %444 = vmatprep.subr.bf16.mxu0 0
        %445 = vmatpush1.bf16.msra.mxu0 0
        %446 = vmatprep.subr.bf16.mxu0 0
        %447 = vmatpush1.bf16.msra.mxu0 0
        %448 = vmatprep.subr.bf16.mxu0 0
        %449 = vmatpush1.bf16.msra.mxu0 0
        %450 = vmatprep.subr.bf16.mxu0 0
        %451 = vmatpush1.bf16.msra.mxu0 0
        %452 = vmatprep.subr.bf16.mxu0 0
        %453 = vmatpush1.bf16.msra.mxu0 0
        %454 = vmatprep.subr.bf16.mxu0 0
        %455 = vmatpush1.bf16.msra.mxu0 0
        %456 = vmatprep.subr.bf16.mxu0 %v437
        %457 = vmatpush1.bf16.msra.mxu0 %v434
        %458 = vmatprep.subr.bf16.mxu0 0
        %459 = vmatpush2.bf16.msra.mxu0 0
        %460 = vmatprep.subr.bf16.mxu0 0
        %461 = vmatpush2.bf16.msra.mxu0 0
        %462 = vmatprep.subr.bf16.mxu0 0
        %463 = vmatpush2.bf16.msra.mxu0 0
        %464 = vmatprep.subr.bf16.mxu0 0
        %465 = vmatpush2.bf16.msra.mxu0 0
        %466 = vmatprep.subr.bf16.mxu0 0
        %467 = vmatpush2.bf16.msra.mxu0 0
        %468 = vmatprep.subr.bf16.mxu0 0
        %469 = vmatpush2.bf16.msra.mxu0 0
        %470 = vmatprep.subr.bf16.mxu0 0
        %471 = vmatpush2.bf16.msra.mxu0 0
        %472 = vmatprep.subr.bf16.mxu0 0
        %473 = vmatpush2.bf16.msra.mxu0 0
        %474 = vmatprep.mubr.bf16.mxu0 0
        %475 = vmatmul.mubr.bf16.gmra.mxu0 %v431
        %v476 = vpop.f32.mrf.mxu0
        %v477 = vadd.f32 %v384, %v476
        %v478 = vpop.f32.mrf.mxu0
        %v479 = vadd.f32 %v386, %v478
        %v480 = vpop.f32.mrf.mxu0
        %v481 = vpop.f32.mrf.mxu0
        %482 = vdwg.mxu0
        %483 = vmatprep.subr.bf16.mxu0 0
        %484 = vmatpush1.bf16.msra.mxu0 0
        %485 = vmatprep.subr.bf16.mxu0 0
        %486 = vmatpush1.bf16.msra.mxu0 0
        %487 = vmatprep.subr.bf16.mxu0 0
        %488 = vmatpush1.bf16.msra.mxu0 0
        %489 = vmatprep.subr.bf16.mxu0 0
        %490 = vmatpush1.bf16.msra.mxu0 0
        %491 = vmatprep.subr.bf16.mxu0 0
        %492 = vmatpush1.bf16.msra.mxu0 0
        %493 = vmatprep.subr.bf16.mxu0 0
        %494 = vmatpush1.bf16.msra.mxu0 0
        %495 = vmatprep.subr.bf16.mxu0 0
        %496 = vmatpush1.bf16.msra.mxu0 0
        %497 = vmatprep.subr.bf16.mxu0 0
        %498 = vmatpush1.bf16.msra.mxu0 %v440
        %499 = vmatprep.subr.bf16.mxu0 0
        %500 = vmatpush2.bf16.msra.mxu0 0
        %501 = vmatprep.subr.bf16.mxu0 0
        %502 = vmatpush2.bf16.msra.mxu0 0
        %503 = vmatprep.subr.bf16.mxu0 0
        %504 = vmatpush2.bf16.msra.mxu0 0
        %505 = vmatprep.subr.bf16.mxu0 0
        %506 = vmatpush2.bf16.msra.mxu0 0
        %507 = vmatprep.subr.bf16.mxu0 0
        %508 = vmatpush2.bf16.msra.mxu0 0
        %509 = vmatprep.subr.bf16.mxu0 0
        %510 = vmatpush2.bf16.msra.mxu0 0
        %511 = vmatprep.subr.bf16.mxu0 0
        %512 = vmatpush2.bf16.msra.mxu0 0
        %513 = vmatprep.subr.bf16.mxu0 0
        %514 = vmatpush2.bf16.msra.mxu0 0
        %515 = vmatprep.mubr.bf16.mxu0 0
        %516 = vmatmul.mubr.bf16.gmra.mxu0 %v431
        %v517 = vpop.f32.mrf.mxu0
        %v518 = vadd.f32 %v425, %v517
        %v519 = vpop.f32.mrf.mxu0
        %v520 = vpop.f32.mrf.mxu0
        %v521 = vpop.f32.mrf.mxu0
        %522 = vdwg.mxu0
        %s523 = scalar_lea.vmem %s2, 8
        %v524 = vld [vmem:[%s523] sm:$0xf]
        %525 = vrot.lane.b32.xlu0 %v317, 126
        %v526 = vpop.permute.xlu0 %525
        %527 = vrot.lane.b32.xlu0 %v325, 126
        %v528 = vpop.permute.xlu0 %527
        %529 = vrot.lane.b32.xlu0 %v324, 126
        %v530 = vpop.permute.xlu0 %529
        %vm531 = vcmask 1031168
        %v532 = vsel %vm531, %v526, %v528
        %v533 = vsel %vm531, %v528, %v530
        %v535 = vsel %vm335, %v524, 0
        %v538 = vsel %vm339, %v532, 0
        %v541 = vsel %vm339, %v533, 0
        %v544 = vsel %vm339, %v530, 0
        %546 = vmatprep.subr.bf16.mxu0 0
        %547 = vmatpush1.bf16.msra.mxu0 0
        %548 = vmatprep.subr.bf16.mxu0 0
        %549 = vmatpush1.bf16.msra.mxu0 0
        %550 = vmatprep.subr.bf16.mxu0 0
        %551 = vmatpush1.bf16.msra.mxu0 0
        %552 = vmatprep.subr.bf16.mxu0 0
        %553 = vmatpush1.bf16.msra.mxu0 0
        %554 = vmatprep.subr.bf16.mxu0 0
        %555 = vmatpush1.bf16.msra.mxu0 0
        %556 = vmatprep.subr.bf16.mxu0 0
        %557 = vmatpush1.bf16.msra.mxu0 0
        %558 = vmatprep.subr.bf16.mxu0 0
        %559 = vmatpush1.bf16.msra.mxu0 0
        %560 = vmatprep.subr.bf16.mxu0 %v541
        %561 = vmatpush1.bf16.msra.mxu0 %v538
        %562 = vmatprep.subr.bf16.mxu0 0
        %563 = vmatpush2.bf16.msra.mxu0 0
        %564 = vmatprep.subr.bf16.mxu0 0
        %565 = vmatpush2.bf16.msra.mxu0 0
        %566 = vmatprep.subr.bf16.mxu0 0
        %567 = vmatpush2.bf16.msra.mxu0 0
        %568 = vmatprep.subr.bf16.mxu0 0
        %569 = vmatpush2.bf16.msra.mxu0 0
        %570 = vmatprep.subr.bf16.mxu0 0
        %571 = vmatpush2.bf16.msra.mxu0 0
        %572 = vmatprep.subr.bf16.mxu0 0
        %573 = vmatpush2.bf16.msra.mxu0 0
        %574 = vmatprep.subr.bf16.mxu0 0
        %575 = vmatpush2.bf16.msra.mxu0 0
        %576 = vmatprep.subr.bf16.mxu0 0
        %577 = vmatpush2.bf16.msra.mxu0 0
        %578 = vmatprep.mubr.bf16.mxu0 0
        %579 = vmatmul.mubr.bf16.gmra.mxu0 %v535
        %v580 = vpop.f32.mrf.mxu0
        %v581 = vadd.f32 0.0, %v580
        %v582 = vpop.f32.mrf.mxu0
        %v583 = vadd.f32 0.0, %v582
        %v584 = vpop.f32.mrf.mxu0
        %v585 = vpop.f32.mrf.mxu0
        %586 = vdwg.mxu0
        %587 = vmatprep.subr.bf16.mxu0 0
        %588 = vmatpush1.bf16.msra.mxu0 0
        %589 = vmatprep.subr.bf16.mxu0 0
        %590 = vmatpush1.bf16.msra.mxu0 0
        %591 = vmatprep.subr.bf16.mxu0 0
        %592 = vmatpush1.bf16.msra.mxu0 0
        %593 = vmatprep.subr.bf16.mxu0 0
        %594 = vmatpush1.bf16.msra.mxu0 0
        %595 = vmatprep.subr.bf16.mxu0 0
        %596 = vmatpush1.bf16.msra.mxu0 0
        %597 = vmatprep.subr.bf16.mxu0 0
        %598 = vmatpush1.bf16.msra.mxu0 0
        %599 = vmatprep.subr.bf16.mxu0 0
        %600 = vmatpush1.bf16.msra.mxu0 0
        %601 = vmatprep.subr.bf16.mxu0 0
        %602 = vmatpush1.bf16.msra.mxu0 %v544
        %603 = vmatprep.subr.bf16.mxu0 0
        %604 = vmatpush2.bf16.msra.mxu0 0
        %605 = vmatprep.subr.bf16.mxu0 0
        %606 = vmatpush2.bf16.msra.mxu0 0
        %607 = vmatprep.subr.bf16.mxu0 0
        %608 = vmatpush2.bf16.msra.mxu0 0
        %609 = vmatprep.subr.bf16.mxu0 0
        %610 = vmatpush2.bf16.msra.mxu0 0
        %611 = vmatprep.subr.bf16.mxu0 0
        %612 = vmatpush2.bf16.msra.mxu0 0
        %613 = vmatprep.subr.bf16.mxu0 0
        %614 = vmatpush2.bf16.msra.mxu0 0
        %615 = vmatprep.subr.bf16.mxu0 0
        %616 = vmatpush2.bf16.msra.mxu0 0
        %617 = vmatprep.subr.bf16.mxu0 0
        %618 = vmatpush2.bf16.msra.mxu0 0
        %619 = vmatprep.mubr.bf16.mxu0 0
        %620 = vmatmul.mubr.bf16.gmra.mxu0 %v535
        %v621 = vpop.f32.mrf.mxu0
        %v622 = vadd.f32 0.0, %v621
        %v623 = vpop.f32.mrf.mxu0
        %v624 = vpop.f32.mrf.mxu0
        %v625 = vpop.f32.mrf.mxu0
        %626 = vdwg.mxu0
        %v627 = vadd.f32 %v477, %v581
        %v628 = vadd.f32 %v479, %v583
        %v629 = vadd.f32 %v518, %v622
        %s630 = scalar_lea.vmem %s2, 12
        %v631 = vld [vmem:[%s630] sm:$0xf]
        %632 = vrot.lane.b32.xlu0 %v317, 110
        %v633 = vpop.permute.xlu0 %632
        %634 = vrot.lane.b32.xlu0 %v325, 110
        %v635 = vpop.permute.xlu0 %634
        %636 = vrot.lane.b32.xlu0 %v324, 110
        %v637 = vpop.permute.xlu0 %636
        %vm638 = vcmask 900096
        %v639 = vsel %vm638, %v633, %v635
        %v640 = vsel %vm638, %v635, %v637
        %v642 = vsel %vm335, %v631, 0
        %v645 = vsel %vm339, %v639, 0
        %v648 = vsel %vm339, %v640, 0
        %v651 = vsel %vm339, %v637, 0
        %653 = vmatprep.subr.bf16.mxu0 0
        %654 = vmatpush1.bf16.msra.mxu0 0
        %655 = vmatprep.subr.bf16.mxu0 0
        %656 = vmatpush1.bf16.msra.mxu0 0
        %657 = vmatprep.subr.bf16.mxu0 0
        %658 = vmatpush1.bf16.msra.mxu0 0
        %659 = vmatprep.subr.bf16.mxu0 0
        %660 = vmatpush1.bf16.msra.mxu0 0
        %661 = vmatprep.subr.bf16.mxu0 0
        %662 = vmatpush1.bf16.msra.mxu0 0
        %663 = vmatprep.subr.bf16.mxu0 0
        %664 = vmatpush1.bf16.msra.mxu0 0
        %665 = vmatprep.subr.bf16.mxu0 0
        %666 = vmatpush1.bf16.msra.mxu0 0
        %667 = vmatprep.subr.bf16.mxu0 %v648
        %668 = vmatpush1.bf16.msra.mxu0 %v645
        %669 = vmatprep.subr.bf16.mxu0 0
        %670 = vmatpush2.bf16.msra.mxu0 0
        %671 = vmatprep.subr.bf16.mxu0 0
        %672 = vmatpush2.bf16.msra.mxu0 0
        %673 = vmatprep.subr.bf16.mxu0 0
        %674 = vmatpush2.bf16.msra.mxu0 0
        %675 = vmatprep.subr.bf16.mxu0 0
        %676 = vmatpush2.bf16.msra.mxu0 0
        %677 = vmatprep.subr.bf16.mxu0 0
        %678 = vmatpush2.bf16.msra.mxu0 0
        %679 = vmatprep.subr.bf16.mxu0 0
        %680 = vmatpush2.bf16.msra.mxu0 0
        %681 = vmatprep.subr.bf16.mxu0 0
        %682 = vmatpush2.bf16.msra.mxu0 0
        %683 = vmatprep.subr.bf16.mxu0 0
        %684 = vmatpush2.bf16.msra.mxu0 0
        %685 = vmatprep.mubr.bf16.mxu0 0
        %686 = vmatmul.mubr.bf16.gmra.mxu0 %v642
        %v687 = vpop.f32.mrf.mxu0
        %v688 = vadd.f32 0.0, %v687
        %v689 = vpop.f32.mrf.mxu0
        %v690 = vadd.f32 0.0, %v689
        %v691 = vpop.f32.mrf.mxu0
        %v692 = vpop.f32.mrf.mxu0
        %693 = vdwg.mxu0
        %694 = vmatprep.subr.bf16.mxu0 0
        %695 = vmatpush1.bf16.msra.mxu0 0
        %696 = vmatprep.subr.bf16.mxu0 0
        %697 = vmatpush1.bf16.msra.mxu0 0
        %698 = vmatprep.subr.bf16.mxu0 0
        %699 = vmatpush1.bf16.msra.mxu0 0
        %700 = vmatprep.subr.bf16.mxu0 0
        %701 = vmatpush1.bf16.msra.mxu0 0
        %702 = vmatprep.subr.bf16.mxu0 0
        %703 = vmatpush1.bf16.msra.mxu0 0
        %704 = vmatprep.subr.bf16.mxu0 0
        %705 = vmatpush1.bf16.msra.mxu0 0
        %706 = vmatprep.subr.bf16.mxu0 0
        %707 = vmatpush1.bf16.msra.mxu0 0
        %708 = vmatprep.subr.bf16.mxu0 0
        %709 = vmatpush1.bf16.msra.mxu0 %v651
        %710 = vmatprep.subr.bf16.mxu0 0
        %711 = vmatpush2.bf16.msra.mxu0 0
        %712 = vmatprep.subr.bf16.mxu0 0
        %713 = vmatpush2.bf16.msra.mxu0 0
        %714 = vmatprep.subr.bf16.mxu0 0
        %715 = vmatpush2.bf16.msra.mxu0 0
        %716 = vmatprep.subr.bf16.mxu0 0
        %717 = vmatpush2.bf16.msra.mxu0 0
        %718 = vmatprep.subr.bf16.mxu0 0
        %719 = vmatpush2.bf16.msra.mxu0 0
        %720 = vmatprep.subr.bf16.mxu0 0
        %721 = vmatpush2.bf16.msra.mxu0 0
        %722 = vmatprep.subr.bf16.mxu0 0
        %723 = vmatpush2.bf16.msra.mxu0 0
        %724 = vmatprep.subr.bf16.mxu0 0
        %725 = vmatpush2.bf16.msra.mxu0 0
        %726 = vmatprep.mubr.bf16.mxu0 0
        %727 = vmatmul.mubr.bf16.gmra.mxu0 %v642
        %v728 = vpop.f32.mrf.mxu0
        %v729 = vadd.f32 0.0, %v728
        %v730 = vpop.f32.mrf.mxu0
        %v731 = vpop.f32.mrf.mxu0
        %v732 = vpop.f32.mrf.mxu0
        %733 = vdwg.mxu0
        %v734 = vadd.f32 %v627, %v688
        %v735 = vadd.f32 %v628, %v690
        %v736 = vadd.f32 %v629, %v729
        %s737 = scalar_lea.vmem %s2, 16
        %v738 = vld [vmem:[%s737] sm:$0xf]
        %739 = vrot.lane.b32.xlu0 %v317, 109
        %v740 = vpop.permute.xlu0 %739
        %741 = vrot.lane.b32.xlu0 %v325, 109
        %v742 = vpop.permute.xlu0 %741
        %743 = vrot.lane.b32.xlu0 %v324, 109
        %v744 = vpop.permute.xlu0 %743
        %vm745 = vcmask 891904
        %v746 = vsel %vm745, %v740, %v742
        %v747 = vsel %vm745, %v742, %v744
        %v749 = vsel %vm335, %v738, 0
        %v752 = vsel %vm339, %v746, 0
        %v755 = vsel %vm339, %v747, 0
        %v758 = vsel %vm339, %v744, 0
        %760 = vmatprep.subr.bf16.mxu0 0
        %761 = vmatpush1.bf16.msra.mxu0 0
        %762 = vmatprep.subr.bf16.mxu0 0
        %763 = vmatpush1.bf16.msra.mxu0 0
        %764 = vmatprep.subr.bf16.mxu0 0
        %765 = vmatpush1.bf16.msra.mxu0 0
        %766 = vmatprep.subr.bf16.mxu0 0
        %767 = vmatpush1.bf16.msra.mxu0 0
        %768 = vmatprep.subr.bf16.mxu0 0
        %769 = vmatpush1.bf16.msra.mxu0 0
        %770 = vmatprep.subr.bf16.mxu0 0
        %771 = vmatpush1.bf16.msra.mxu0 0
        %772 = vmatprep.subr.bf16.mxu0 0
        %773 = vmatpush1.bf16.msra.mxu0 0
        %774 = vmatprep.subr.bf16.mxu0 %v755
        %775 = vmatpush1.bf16.msra.mxu0 %v752
        %776 = vmatprep.subr.bf16.mxu0 0
        %777 = vmatpush2.bf16.msra.mxu0 0
        %778 = vmatprep.subr.bf16.mxu0 0
        %779 = vmatpush2.bf16.msra.mxu0 0
        %780 = vmatprep.subr.bf16.mxu0 0
        %781 = vmatpush2.bf16.msra.mxu0 0
        %782 = vmatprep.subr.bf16.mxu0 0
        %783 = vmatpush2.bf16.msra.mxu0 0
        %784 = vmatprep.subr.bf16.mxu0 0
        %785 = vmatpush2.bf16.msra.mxu0 0
        %786 = vmatprep.subr.bf16.mxu0 0
        %787 = vmatpush2.bf16.msra.mxu0 0
        %788 = vmatprep.subr.bf16.mxu0 0
        %789 = vmatpush2.bf16.msra.mxu0 0
        %790 = vmatprep.subr.bf16.mxu0 0
        %791 = vmatpush2.bf16.msra.mxu0 0
        %792 = vmatprep.mubr.bf16.mxu0 0
        %793 = vmatmul.mubr.bf16.gmra.mxu0 %v749
        %v794 = vpop.f32.mrf.mxu0
        %v795 = vadd.f32 0.0, %v794
        %v796 = vpop.f32.mrf.mxu0
        %v797 = vadd.f32 0.0, %v796
        %v798 = vpop.f32.mrf.mxu0
        %v799 = vpop.f32.mrf.mxu0
        %800 = vdwg.mxu0
        %801 = vmatprep.subr.bf16.mxu0 0
        %802 = vmatpush1.bf16.msra.mxu0 0
        %803 = vmatprep.subr.bf16.mxu0 0
        %804 = vmatpush1.bf16.msra.mxu0 0
        %805 = vmatprep.subr.bf16.mxu0 0
        %806 = vmatpush1.bf16.msra.mxu0 0
        %807 = vmatprep.subr.bf16.mxu0 0
        %808 = vmatpush1.bf16.msra.mxu0 0
        %809 = vmatprep.subr.bf16.mxu0 0
        %810 = vmatpush1.bf16.msra.mxu0 0
        %811 = vmatprep.subr.bf16.mxu0 0
        %812 = vmatpush1.bf16.msra.mxu0 0
        %813 = vmatprep.subr.bf16.mxu0 0
        %814 = vmatpush1.bf16.msra.mxu0 0
        %815 = vmatprep.subr.bf16.mxu0 0
        %816 = vmatpush1.bf16.msra.mxu0 %v758
        %817 = vmatprep.subr.bf16.mxu0 0
        %818 = vmatpush2.bf16.msra.mxu0 0
        %819 = vmatprep.subr.bf16.mxu0 0
        %820 = vmatpush2.bf16.msra.mxu0 0
        %821 = vmatprep.subr.bf16.mxu0 0
        %822 = vmatpush2.bf16.msra.mxu0 0
        %823 = vmatprep.subr.bf16.mxu0 0
        %824 = vmatpush2.bf16.msra.mxu0 0
        %825 = vmatprep.subr.bf16.mxu0 0
        %826 = vmatpush2.bf16.msra.mxu0 0
        %827 = vmatprep.subr.bf16.mxu0 0
        %828 = vmatpush2.bf16.msra.mxu0 0
        %829 = vmatprep.subr.bf16.mxu0 0
        %830 = vmatpush2.bf16.msra.mxu0 0
        %831 = vmatprep.subr.bf16.mxu0 0
        %832 = vmatpush2.bf16.msra.mxu0 0
        %833 = vmatprep.mubr.bf16.mxu0 0
        %834 = vmatmul.mubr.bf16.gmra.mxu0 %v749
        %v835 = vpop.f32.mrf.mxu0
        %v836 = vadd.f32 0.0, %v835
        %v837 = vpop.f32.mrf.mxu0
        %v838 = vpop.f32.mrf.mxu0
        %v839 = vpop.f32.mrf.mxu0
        %840 = vdwg.mxu0
        %v841 = vadd.f32 %v734, %v795
        %v842 = vadd.f32 %v735, %v797
        %v843 = vadd.f32 %v736, %v836
        %s844 = scalar_lea.vmem %s2, 20
        %v845 = vld [vmem:[%s844] sm:$0xf]
        %846 = vrot.lane.b32.xlu0 %v317, 108
        %v847 = vpop.permute.xlu0 %846
        %848 = vrot.lane.b32.xlu0 %v325, 108
        %v849 = vpop.permute.xlu0 %848
        %850 = vrot.lane.b32.xlu0 %v324, 108
        %v851 = vpop.permute.xlu0 %850
        %vm852 = vcmask 883712
        %v853 = vsel %vm852, %v847, %v849
        %v854 = vsel %vm852, %v849, %v851
        %v856 = vsel %vm335, %v845, 0
        %v859 = vsel %vm339, %v853, 0
        %v862 = vsel %vm339, %v854, 0
        %v865 = vsel %vm339, %v851, 0
        %867 = vmatprep.subr.bf16.mxu0 0
        %868 = vmatpush1.bf16.msra.mxu0 0
        %869 = vmatprep.subr.bf16.mxu0 0
        %870 = vmatpush1.bf16.msra.mxu0 0
        %871 = vmatprep.subr.bf16.mxu0 0
        %872 = vmatpush1.bf16.msra.mxu0 0
        %873 = vmatprep.subr.bf16.mxu0 0
        %874 = vmatpush1.bf16.msra.mxu0 0
        %875 = vmatprep.subr.bf16.mxu0 0
        %876 = vmatpush1.bf16.msra.mxu0 0
        %877 = vmatprep.subr.bf16.mxu0 0
        %878 = vmatpush1.bf16.msra.mxu0 0
        %879 = vmatprep.subr.bf16.mxu0 0
        %880 = vmatpush1.bf16.msra.mxu0 0
        %881 = vmatprep.subr.bf16.mxu0 %v862
        %882 = vmatpush1.bf16.msra.mxu0 %v859
        %883 = vmatprep.subr.bf16.mxu0 0
        %884 = vmatpush2.bf16.msra.mxu0 0
        %885 = vmatprep.subr.bf16.mxu0 0
        %886 = vmatpush2.bf16.msra.mxu0 0
        %887 = vmatprep.subr.bf16.mxu0 0
        %888 = vmatpush2.bf16.msra.mxu0 0
        %889 = vmatprep.subr.bf16.mxu0 0
        %890 = vmatpush2.bf16.msra.mxu0 0
        %891 = vmatprep.subr.bf16.mxu0 0
        %892 = vmatpush2.bf16.msra.mxu0 0
        %893 = vmatprep.subr.bf16.mxu0 0
        %894 = vmatpush2.bf16.msra.mxu0 0
        %895 = vmatprep.subr.bf16.mxu0 0
        %896 = vmatpush2.bf16.msra.mxu0 0
        %897 = vmatprep.subr.bf16.mxu0 0
        %898 = vmatpush2.bf16.msra.mxu0 0
        %899 = vmatprep.mubr.bf16.mxu0 0
        %900 = vmatmul.mubr.bf16.gmra.mxu0 %v856
        %v901 = vpop.f32.mrf.mxu0
        %v902 = vadd.f32 0.0, %v901
        %v903 = vpop.f32.mrf.mxu0
        %v904 = vadd.f32 0.0, %v903
        %v905 = vpop.f32.mrf.mxu0
        %v906 = vpop.f32.mrf.mxu0
        %907 = vdwg.mxu0
        %908 = vmatprep.subr.bf16.mxu0 0
        %909 = vmatpush1.bf16.msra.mxu0 0
        %910 = vmatprep.subr.bf16.mxu0 0
        %911 = vmatpush1.bf16.msra.mxu0 0
        %912 = vmatprep.subr.bf16.mxu0 0
        %913 = vmatpush1.bf16.msra.mxu0 0
        %914 = vmatprep.subr.bf16.mxu0 0
        %915 = vmatpush1.bf16.msra.mxu0 0
        %916 = vmatprep.subr.bf16.mxu0 0
        %917 = vmatpush1.bf16.msra.mxu0 0
        %918 = vmatprep.subr.bf16.mxu0 0
        %919 = vmatpush1.bf16.msra.mxu0 0
        %920 = vmatprep.subr.bf16.mxu0 0
        %921 = vmatpush1.bf16.msra.mxu0 0
        %922 = vmatprep.subr.bf16.mxu0 0
        %923 = vmatpush1.bf16.msra.mxu0 %v865
        %924 = vmatprep.subr.bf16.mxu0 0
        %925 = vmatpush2.bf16.msra.mxu0 0
        %926 = vmatprep.subr.bf16.mxu0 0
        %927 = vmatpush2.bf16.msra.mxu0 0
        %928 = vmatprep.subr.bf16.mxu0 0
        %929 = vmatpush2.bf16.msra.mxu0 0
        %930 = vmatprep.subr.bf16.mxu0 0
        %931 = vmatpush2.bf16.msra.mxu0 0
        %932 = vmatprep.subr.bf16.mxu0 0
        %933 = vmatpush2.bf16.msra.mxu0 0
        %934 = vmatprep.subr.bf16.mxu0 0
        %935 = vmatpush2.bf16.msra.mxu0 0
        %936 = vmatprep.subr.bf16.mxu0 0
        %937 = vmatpush2.bf16.msra.mxu0 0
        %938 = vmatprep.subr.bf16.mxu0 0
        %939 = vmatpush2.bf16.msra.mxu0 0
        %940 = vmatprep.mubr.bf16.mxu0 0
        %941 = vmatmul.mubr.bf16.gmra.mxu0 %v856
        %v942 = vpop.f32.mrf.mxu0
        %v943 = vadd.f32 0.0, %v942
        %v944 = vpop.f32.mrf.mxu0
        %v945 = vpop.f32.mrf.mxu0
        %v946 = vpop.f32.mrf.mxu0
        %947 = vdwg.mxu0
        %v948 = vadd.f32 %v841, %v902
        %v949 = vadd.f32 %v842, %v904
        %v950 = vadd.f32 %v843, %v943
        %s951 = scalar_lea.vmem %s2, 24
        %v952 = vld [vmem:[%s951] sm:$0xf]
        %953 = vrot.lane.b32.xlu0 %v317, 92
        %v954 = vpop.permute.xlu0 %953
        %955 = vrot.lane.b32.xlu0 %v325, 92
        %v956 = vpop.permute.xlu0 %955
        %957 = vrot.lane.b32.xlu0 %v324, 92
        %v958 = vpop.permute.xlu0 %957
        %vm959 = vcmask 752640
        %v960 = vsel %vm959, %v954, %v956
        %v961 = vsel %vm959, %v956, %v958
        %v963 = vsel %vm335, %v952, 0
        %v966 = vsel %vm339, %v960, 0
        %v969 = vsel %vm339, %v961, 0
        %v972 = vsel %vm339, %v958, 0
        %974 = vmatprep.subr.bf16.mxu0 0
        %975 = vmatpush1.bf16.msra.mxu0 0
        %976 = vmatprep.subr.bf16.mxu0 0
        %977 = vmatpush1.bf16.msra.mxu0 0
        %978 = vmatprep.subr.bf16.mxu0 0
        %979 = vmatpush1.bf16.msra.mxu0 0
        %980 = vmatprep.subr.bf16.mxu0 0
        %981 = vmatpush1.bf16.msra.mxu0 0
        %982 = vmatprep.subr.bf16.mxu0 0
        %983 = vmatpush1.bf16.msra.mxu0 0
        %984 = vmatprep.subr.bf16.mxu0 0
        %985 = vmatpush1.bf16.msra.mxu0 0
        %986 = vmatprep.subr.bf16.mxu0 0
        %987 = vmatpush1.bf16.msra.mxu0 0
        %988 = vmatprep.subr.bf16.mxu0 %v969
        %989 = vmatpush1.bf16.msra.mxu0 %v966
        %990 = vmatprep.subr.bf16.mxu0 0
        %991 = vmatpush2.bf16.msra.mxu0 0
        %992 = vmatprep.subr.bf16.mxu0 0
        %993 = vmatpush2.bf16.msra.mxu0 0
        %994 = vmatprep.subr.bf16.mxu0 0
        %995 = vmatpush2.bf16.msra.mxu0 0
        %996 = vmatprep.subr.bf16.mxu0 0
        %997 = vmatpush2.bf16.msra.mxu0 0
        %998 = vmatprep.subr.bf16.mxu0 0
        %999 = vmatpush2.bf16.msra.mxu0 0
        %1000 = vmatprep.subr.bf16.mxu0 0
        %1001 = vmatpush2.bf16.msra.mxu0 0
        %1002 = vmatprep.subr.bf16.mxu0 0
        %1003 = vmatpush2.bf16.msra.mxu0 0
        %1004 = vmatprep.subr.bf16.mxu0 0
        %1005 = vmatpush2.bf16.msra.mxu0 0
        %1006 = vmatprep.mubr.bf16.mxu0 0
        %1007 = vmatmul.mubr.bf16.gmra.mxu0 %v963
        %v1008 = vpop.f32.mrf.mxu0
        %v1009 = vadd.f32 0.0, %v1008
        %v1010 = vpop.f32.mrf.mxu0
        %v1011 = vadd.f32 0.0, %v1010
        %v1012 = vpop.f32.mrf.mxu0
        %v1013 = vpop.f32.mrf.mxu0
        %1014 = vdwg.mxu0
        %1015 = vmatprep.subr.bf16.mxu0 0
        %1016 = vmatpush1.bf16.msra.mxu0 0
        %1017 = vmatprep.subr.bf16.mxu0 0
        %1018 = vmatpush1.bf16.msra.mxu0 0
        %1019 = vmatprep.subr.bf16.mxu0 0
        %1020 = vmatpush1.bf16.msra.mxu0 0
        %1021 = vmatprep.subr.bf16.mxu0 0
        %1022 = vmatpush1.bf16.msra.mxu0 0
        %1023 = vmatprep.subr.bf16.mxu0 0
        %1024 = vmatpush1.bf16.msra.mxu0 0
        %1025 = vmatprep.subr.bf16.mxu0 0
        %1026 = vmatpush1.bf16.msra.mxu0 0
        %1027 = vmatprep.subr.bf16.mxu0 0
        %1028 = vmatpush1.bf16.msra.mxu0 0
        %1029 = vmatprep.subr.bf16.mxu0 0
        %1030 = vmatpush1.bf16.msra.mxu0 %v972
        %1031 = vmatprep.subr.bf16.mxu0 0
        %1032 = vmatpush2.bf16.msra.mxu0 0
        %1033 = vmatprep.subr.bf16.mxu0 0
        %1034 = vmatpush2.bf16.msra.mxu0 0
        %1035 = vmatprep.subr.bf16.mxu0 0
        %1036 = vmatpush2.bf16.msra.mxu0 0
        %1037 = vmatprep.subr.bf16.mxu0 0
        %1038 = vmatpush2.bf16.msra.mxu0 0
        %1039 = vmatprep.subr.bf16.mxu0 0
        %1040 = vmatpush2.bf16.msra.mxu0 0
        %1041 = vmatprep.subr.bf16.mxu0 0
        %1042 = vmatpush2.bf16.msra.mxu0 0
        %1043 = vmatprep.subr.bf16.mxu0 0
        %1044 = vmatpush2.bf16.msra.mxu0 0
        %1045 = vmatprep.subr.bf16.mxu0 0
        %1046 = vmatpush2.bf16.msra.mxu0 0
        %1047 = vmatprep.mubr.bf16.mxu0 0
        %1048 = vmatmul.mubr.bf16.gmra.mxu0 %v963
        %v1049 = vpop.f32.mrf.mxu0
        %v1050 = vadd.f32 0.0, %v1049
        %v1051 = vpop.f32.mrf.mxu0
        %v1052 = vpop.f32.mrf.mxu0
        %v1053 = vpop.f32.mrf.mxu0
        %1054 = vdwg.mxu0
        %v1055 = vadd.f32 %v948, %v1009
        %v1056 = vadd.f32 %v949, %v1011
        %v1057 = vadd.f32 %v950, %v1050
        %s1058 = scalar_lea.vmem %s2, 28
        %v1059 = vld [vmem:[%s1058] sm:$0xf]
        %1060 = vrot.lane.b32.xlu0 %v317, 91
        %v1061 = vpop.permute.xlu0 %1060
        %1062 = vrot.lane.b32.xlu0 %v325, 91
        %v1063 = vpop.permute.xlu0 %1062
        %1064 = vrot.lane.b32.xlu0 %v324, 91
        %v1065 = vpop.permute.xlu0 %1064
        %vm1066 = vcmask 744448
        %v1067 = vsel %vm1066, %v1061, %v1063
        %v1068 = vsel %vm1066, %v1063, %v1065
        %v1070 = vsel %vm335, %v1059, 0
        %v1073 = vsel %vm339, %v1067, 0
        %v1076 = vsel %vm339, %v1068, 0
        %v1079 = vsel %vm339, %v1065, 0
        %1081 = vmatprep.subr.bf16.mxu0 0
        %1082 = vmatpush1.bf16.msra.mxu0 0
        %1083 = vmatprep.subr.bf16.mxu0 0
        %1084 = vmatpush1.bf16.msra.mxu0 0
        %1085 = vmatprep.subr.bf16.mxu0 0
        %1086 = vmatpush1.bf16.msra.mxu0 0
        %1087 = vmatprep.subr.bf16.mxu0 0
        %1088 = vmatpush1.bf16.msra.mxu0 0
        %1089 = vmatprep.subr.bf16.mxu0 0
        %1090 = vmatpush1.bf16.msra.mxu0 0
        %1091 = vmatprep.subr.bf16.mxu0 0
        %1092 = vmatpush1.bf16.msra.mxu0 0
        %1093 = vmatprep.subr.bf16.mxu0 0
        %1094 = vmatpush1.bf16.msra.mxu0 0
        %1095 = vmatprep.subr.bf16.mxu0 %v1076
        %1096 = vmatpush1.bf16.msra.mxu0 %v1073
        %1097 = vmatprep.subr.bf16.mxu0 0
        %1098 = vmatpush2.bf16.msra.mxu0 0
        %1099 = vmatprep.subr.bf16.mxu0 0
        %1100 = vmatpush2.bf16.msra.mxu0 0
        %1101 = vmatprep.subr.bf16.mxu0 0
        %1102 = vmatpush2.bf16.msra.mxu0 0
        %1103 = vmatprep.subr.bf16.mxu0 0
        %1104 = vmatpush2.bf16.msra.mxu0 0
        %1105 = vmatprep.subr.bf16.mxu0 0
        %1106 = vmatpush2.bf16.msra.mxu0 0
        %1107 = vmatprep.subr.bf16.mxu0 0
        %1108 = vmatpush2.bf16.msra.mxu0 0
        %1109 = vmatprep.subr.bf16.mxu0 0
        %1110 = vmatpush2.bf16.msra.mxu0 0
        %1111 = vmatprep.subr.bf16.mxu0 0
        %1112 = vmatpush2.bf16.msra.mxu0 0
        %1113 = vmatprep.mubr.bf16.mxu0 0
        %1114 = vmatmul.mubr.bf16.gmra.mxu0 %v1070
        %v1115 = vpop.f32.mrf.mxu0
        %v1116 = vadd.f32 0.0, %v1115
        %v1117 = vpop.f32.mrf.mxu0
        %v1118 = vadd.f32 0.0, %v1117
        %v1119 = vpop.f32.mrf.mxu0
        %v1120 = vpop.f32.mrf.mxu0
        %1121 = vdwg.mxu0
        %1122 = vmatprep.subr.bf16.mxu0 0
        %1123 = vmatpush1.bf16.msra.mxu0 0
        %1124 = vmatprep.subr.bf16.mxu0 0
        %1125 = vmatpush1.bf16.msra.mxu0 0
        %1126 = vmatprep.subr.bf16.mxu0 0
        %1127 = vmatpush1.bf16.msra.mxu0 0
        %1128 = vmatprep.subr.bf16.mxu0 0
        %1129 = vmatpush1.bf16.msra.mxu0 0
        %1130 = vmatprep.subr.bf16.mxu0 0
        %1131 = vmatpush1.bf16.msra.mxu0 0
        %1132 = vmatprep.subr.bf16.mxu0 0
        %1133 = vmatpush1.bf16.msra.mxu0 0
        %1134 = vmatprep.subr.bf16.mxu0 0
        %1135 = vmatpush1.bf16.msra.mxu0 0
        %1136 = vmatprep.subr.bf16.mxu0 0
        %1137 = vmatpush1.bf16.msra.mxu0 %v1079
        %1138 = vmatprep.subr.bf16.mxu0 0
        %1139 = vmatpush2.bf16.msra.mxu0 0
        %1140 = vmatprep.subr.bf16.mxu0 0
        %1141 = vmatpush2.bf16.msra.mxu0 0
        %1142 = vmatprep.subr.bf16.mxu0 0
        %1143 = vmatpush2.bf16.msra.mxu0 0
        %1144 = vmatprep.subr.bf16.mxu0 0
        %1145 = vmatpush2.bf16.msra.mxu0 0
        %1146 = vmatprep.subr.bf16.mxu0 0
        %1147 = vmatpush2.bf16.msra.mxu0 0
        %1148 = vmatprep.subr.bf16.mxu0 0
        %1149 = vmatpush2.bf16.msra.mxu0 0
        %1150 = vmatprep.subr.bf16.mxu0 0
        %1151 = vmatpush2.bf16.msra.mxu0 0
        %1152 = vmatprep.subr.bf16.mxu0 0
        %1153 = vmatpush2.bf16.msra.mxu0 0
        %1154 = vmatprep.mubr.bf16.mxu0 0
        %1155 = vmatmul.mubr.bf16.gmra.mxu0 %v1070
        %v1156 = vpop.f32.mrf.mxu0
        %v1157 = vadd.f32 0.0, %v1156
        %v1158 = vpop.f32.mrf.mxu0
        %v1159 = vpop.f32.mrf.mxu0
        %v1160 = vpop.f32.mrf.mxu0
        %1161 = vdwg.mxu0
        %v1162 = vadd.f32 %v1055, %v1116
        %v1163 = vadd.f32 %v1056, %v1118
        %v1164 = vadd.f32 %v1057, %v1157
        %s1165 = scalar_lea.vmem %s2, 32
        %v1166 = vld [vmem:[%s1165] sm:$0xf]
        %1167 = vrot.lane.b32.xlu0 %v317, 90
        %v1168 = vpop.permute.xlu0 %1167
        %1169 = vrot.lane.b32.xlu0 %v325, 90
        %v1170 = vpop.permute.xlu0 %1169
        %1171 = vrot.lane.b32.xlu0 %v324, 90
        %v1172 = vpop.permute.xlu0 %1171
        %vm1173 = vcmask 736256
        %v1174 = vsel %vm1173, %v1168, %v1170
        %v1175 = vsel %vm1173, %v1170, %v1172
        %v1177 = vsel %vm335, %v1166, 0
        %v1180 = vsel %vm339, %v1174, 0
        %v1183 = vsel %vm339, %v1175, 0
        %v1186 = vsel %vm339, %v1172, 0
        %1188 = vmatprep.subr.bf16.mxu0 0
        %1189 = vmatpush1.bf16.msra.mxu0 0
        %1190 = vmatprep.subr.bf16.mxu0 0
        %1191 = vmatpush1.bf16.msra.mxu0 0
        %1192 = vmatprep.subr.bf16.mxu0 0
        %1193 = vmatpush1.bf16.msra.mxu0 0
        %1194 = vmatprep.subr.bf16.mxu0 0
        %1195 = vmatpush1.bf16.msra.mxu0 0
        %1196 = vmatprep.subr.bf16.mxu0 0
        %1197 = vmatpush1.bf16.msra.mxu0 0
        %1198 = vmatprep.subr.bf16.mxu0 0
        %1199 = vmatpush1.bf16.msra.mxu0 0
        %1200 = vmatprep.subr.bf16.mxu0 0
        %1201 = vmatpush1.bf16.msra.mxu0 0
        %1202 = vmatprep.subr.bf16.mxu0 %v1183
        %1203 = vmatpush1.bf16.msra.mxu0 %v1180
        %1204 = vmatprep.subr.bf16.mxu0 0
        %1205 = vmatpush2.bf16.msra.mxu0 0
        %1206 = vmatprep.subr.bf16.mxu0 0
        %1207 = vmatpush2.bf16.msra.mxu0 0
        %1208 = vmatprep.subr.bf16.mxu0 0
        %1209 = vmatpush2.bf16.msra.mxu0 0
        %1210 = vmatprep.subr.bf16.mxu0 0
        %1211 = vmatpush2.bf16.msra.mxu0 0
        %1212 = vmatprep.subr.bf16.mxu0 0
        %1213 = vmatpush2.bf16.msra.mxu0 0
        %1214 = vmatprep.subr.bf16.mxu0 0
        %1215 = vmatpush2.bf16.msra.mxu0 0
        %1216 = vmatprep.subr.bf16.mxu0 0
        %1217 = vmatpush2.bf16.msra.mxu0 0
        %1218 = vmatprep.subr.bf16.mxu0 0
        %1219 = vmatpush2.bf16.msra.mxu0 0
        %1220 = vmatprep.mubr.bf16.mxu0 0
        %1221 = vmatmul.mubr.bf16.gmra.mxu0 %v1177
        %v1222 = vpop.f32.mrf.mxu0
        %v1223 = vadd.f32 0.0, %v1222
        %v1224 = vpop.f32.mrf.mxu0
        %v1225 = vadd.f32 0.0, %v1224
        %v1226 = vpop.f32.mrf.mxu0
        %v1227 = vpop.f32.mrf.mxu0
        %1228 = vdwg.mxu0
        %1229 = vmatprep.subr.bf16.mxu0 0
        %1230 = vmatpush1.bf16.msra.mxu0 0
        %1231 = vmatprep.subr.bf16.mxu0 0
        %1232 = vmatpush1.bf16.msra.mxu0 0
        %1233 = vmatprep.subr.bf16.mxu0 0
        %1234 = vmatpush1.bf16.msra.mxu0 0
        %1235 = vmatprep.subr.bf16.mxu0 0
        %1236 = vmatpush1.bf16.msra.mxu0 0
        %1237 = vmatprep.subr.bf16.mxu0 0
        %1238 = vmatpush1.bf16.msra.mxu0 0
        %1239 = vmatprep.subr.bf16.mxu0 0
        %1240 = vmatpush1.bf16.msra.mxu0 0
        %1241 = vmatprep.subr.bf16.mxu0 0
        %1242 = vmatpush1.bf16.msra.mxu0 0
        %1243 = vmatprep.subr.bf16.mxu0 0
        %1244 = vmatpush1.bf16.msra.mxu0 %v1186
        %1245 = vmatprep.subr.bf16.mxu0 0
        %1246 = vmatpush2.bf16.msra.mxu0 0
        %1247 = vmatprep.subr.bf16.mxu0 0
        %1248 = vmatpush2.bf16.msra.mxu0 0
        %1249 = vmatprep.subr.bf16.mxu0 0
        %1250 = vmatpush2.bf16.msra.mxu0 0
        %1251 = vmatprep.subr.bf16.mxu0 0
        %1252 = vmatpush2.bf16.msra.mxu0 0
        %1253 = vmatprep.subr.bf16.mxu0 0
        %1254 = vmatpush2.bf16.msra.mxu0 0
        %1255 = vmatprep.subr.bf16.mxu0 0
        %1256 = vmatpush2.bf16.msra.mxu0 0
        %1257 = vmatprep.subr.bf16.mxu0 0
        %1258 = vmatpush2.bf16.msra.mxu0 0
        %1259 = vmatprep.subr.bf16.mxu0 0
        %1260 = vmatpush2.bf16.msra.mxu0 0
        %1261 = vmatprep.mubr.bf16.mxu0 0
        %1262 = vmatmul.mubr.bf16.gmra.mxu0 %v1177
        %v1263 = vpop.f32.mrf.mxu0
        %v1264 = vadd.f32 0.0, %v1263
        %v1265 = vpop.f32.mrf.mxu0
        %v1266 = vpop.f32.mrf.mxu0
        %v1267 = vpop.f32.mrf.mxu0
        %1268 = vdwg.mxu0
        %v1269 = vadd.f32 %v1162, %v1223
        %v1270 = vadd.f32 %v1163, %v1225
        %v1271 = vadd.f32 %v1164, %v1264
        %v1272 = vld [vmem:[%s3] sm:$0xff]
        %1274 = vset.pattern.permute.xlu0 0
        %1275 = vperm.xlu0 %1274, %v1272
        %v1276 = vpop.permute.xlu0 %1275
        %v1278 = vadd.f32 %v1269, %v1276
        %v1279 = vadd.f32 %v1270, %v1276
        %v1280 = vadd.f32 %v1271, %v1276
        %v1281 = vmax.f32 %v1278, 0.0
        %v1282 = vmax.f32 %v1279, 0.0
        %v1283 = vmax.f32 %v1280, 0.0
        %v1284 = vld [vmem:[%s1] sm:$0x7]
        %v1286 = vlaneseq
        %v1287 = vshrl.u32 %v1286, 7
        %v1288 = vsub.s32 0, %v1287
        %v1289 = vrot.slane %v1284, %v1288
        %v1290 = vlaneseq
        %v1291 = vshrl.u32 %v1290, 7
        %v1292 = vsub.s32 1, %v1291
        %v1293 = vrot.slane %v1284, %v1292
        %v1294 = vlaneseq
        %v1295 = vshrl.u32 %v1294, 7
        %v1296 = vsub.s32 2, %v1295
        %v1297 = vrot.slane %v1284, %v1296
        %v1301 = vmul.f32 %v1281, %v1289
        %v1302 = vmul.f32 %v1282, %v1293
        %v1303 = vmul.f32 %v1283, %v1297
        %vm1304 = vcmask 150528
        %1305 = vst.msk [vmem:[#allocation2] sm:$0xf] %vm1304, 0
        %vm1306 = vcmask 1043864
        %1307 = vst.msk [vmem:[#allocation2 + $0x8] sm:$0xf] %vm1306, 0
        %v1308 = vpack.c.bf16 %v1301, %v1301
        %v1309 = vpack.c.bf16 %v1302, %v1302
        %v1310 = vpack.c.bf16 %v1303, %v1303
        %v1314 = vunpack.c.l.b16 %v1308
        %v1315 = vunpack.c.l.b16 %v1309
        %v1316 = vunpack.c.l.b16 %v1310
        %v1317 = vpack.c.b16 %v1315, %v1314
        %v1318 = vpack.c.b16 %v1316, %v1316
        %1319 = vrot.lane.b32.xlu0 %v1317, 19
        %v1320 = vpop.permute.xlu0 %1319
        %1321 = vrot.lane.b32.xlu0 %v1318, 19
        %v1322 = vpop.permute.xlu0 %1321
        %v1323 = vrot.slane %v1320, 4
        %vm1324 = vcmask 154624
        %v1325 = vsel %vm1324, %v1323, %v1320
        %v1326 = vsel %vm1324, %v1323, %v1322
        %vm1329 = vcmask 1043608
        %vm1330 = vcmask 1047556
        %vm1331 = vmor %vm1330, %vm1329
        %1332 = vst.msk [vmem:[#allocation2] sm:$0xff] %vm1331, %v1325
        %vm1333 = vcmask 412672
        %1334 = vst.msk [vmem:[#allocation2 + $0x8] sm:$0xf] %vm1333, %v1326
        %v1335 = vld [vmem:[%s4] sm:$0xf]
        %v1336 = vld [vmem:[#allocation2] sm:$0xff]
        %v1337 = vld [vmem:[#allocation2 + $0x8] sm:$0xf]
        %s1338 = scalar_lea.vmem %s4, 4
        %v1339 = vld [vmem:[%s1338] sm:$0xf]
        %v1342 = vunpack.c.l.b16 %v1336
        %v1343 = vunpack.c.h.b16 %v1336
        %v1344 = vunpack.c.l.b16 %v1337
        %v1345 = vpack.c.b16 %v1342, %v1342
        %v1346 = vpack.c.b16 %v1343, %v1343
        %v1347 = vpack.c.b16 %v1344, %v1344
        %1348 = vrot.lane.b32.xlu0 %v1345, 127
        %v1349 = vpop.permute.xlu0 %1348
        %1350 = vrot.lane.b32.xlu0 %v1346, 127
        %v1351 = vpop.permute.xlu0 %1350
        %1352 = vrot.lane.b32.xlu0 %v1347, 127
        %v1353 = vpop.permute.xlu0 %1352
        %v1354 = vsel %vm332, %v1349, %v1351
        %v1355 = vsel %vm332, %v1351, %v1353
        %vm1356 = vcmask 64512
        %v1358 = vsel %vm1356, %v1339, 0
        %vm1360 = vcmask 1043456
        %v1362 = vsel %vm1360, %v1354, 0
        %v1365 = vsel %vm1360, %v1355, 0
        %v1368 = vsel %vm1360, %v1353, 0
        %1370 = vmatprep.subr.bf16.mxu0 0
        %1371 = vmatpush1.bf16.msra.mxu0 0
        %1372 = vmatprep.subr.bf16.mxu0 0
        %1373 = vmatpush1.bf16.msra.mxu0 0
        %1374 = vmatprep.subr.bf16.mxu0 0
        %1375 = vmatpush1.bf16.msra.mxu0 0
        %1376 = vmatprep.subr.bf16.mxu0 0
        %1377 = vmatpush1.bf16.msra.mxu0 0
        %1378 = vmatprep.subr.bf16.mxu0 0
        %1379 = vmatpush1.bf16.msra.mxu0 0
        %1380 = vmatprep.subr.bf16.mxu0 0
        %1381 = vmatpush1.bf16.msra.mxu0 0
        %1382 = vmatprep.subr.bf16.mxu0 0
        %1383 = vmatpush1.bf16.msra.mxu0 0
        %1384 = vmatprep.subr.bf16.mxu0 %v1365
        %1385 = vmatpush1.bf16.msra.mxu0 %v1362
        %1386 = vmatprep.subr.bf16.mxu0 0
        %1387 = vmatpush2.bf16.msra.mxu0 0
        %1388 = vmatprep.subr.bf16.mxu0 0
        %1389 = vmatpush2.bf16.msra.mxu0 0
        %1390 = vmatprep.subr.bf16.mxu0 0
        %1391 = vmatpush2.bf16.msra.mxu0 0
        %1392 = vmatprep.subr.bf16.mxu0 0
        %1393 = vmatpush2.bf16.msra.mxu0 0
        %1394 = vmatprep.subr.bf16.mxu0 0
        %1395 = vmatpush2.bf16.msra.mxu0 0
        %1396 = vmatprep.subr.bf16.mxu0 0
        %1397 = vmatpush2.bf16.msra.mxu0 0
        %1398 = vmatprep.subr.bf16.mxu0 0
        %1399 = vmatpush2.bf16.msra.mxu0 0
        %1400 = vmatprep.subr.bf16.mxu0 0
        %1401 = vmatpush2.bf16.msra.mxu0 0
        %1402 = vmatprep.mubr.bf16.mxu0 0
        %1403 = vmatmul.mubr.bf16.gmra.mxu0 %v1358
        %v1404 = vpop.f32.mrf.mxu0
        %v1405 = vadd.f32 0.0, %v1404
        %v1406 = vpop.f32.mrf.mxu0
        %v1407 = vadd.f32 0.0, %v1406
        %v1408 = vpop.f32.mrf.mxu0
        %v1409 = vpop.f32.mrf.mxu0
        %1410 = vdwg.mxu0
        %1411 = vmatprep.subr.bf16.mxu0 0
        %1412 = vmatpush1.bf16.msra.mxu0 0
        %1413 = vmatprep.subr.bf16.mxu0 0
        %1414 = vmatpush1.bf16.msra.mxu0 0
        %1415 = vmatprep.subr.bf16.mxu0 0
        %1416 = vmatpush1.bf16.msra.mxu0 0
        %1417 = vmatprep.subr.bf16.mxu0 0
        %1418 = vmatpush1.bf16.msra.mxu0 0
        %1419 = vmatprep.subr.bf16.mxu0 0
        %1420 = vmatpush1.bf16.msra.mxu0 0
        %1421 = vmatprep.subr.bf16.mxu0 0
        %1422 = vmatpush1.bf16.msra.mxu0 0
        %1423 = vmatprep.subr.bf16.mxu0 0
        %1424 = vmatpush1.bf16.msra.mxu0 0
        %1425 = vmatprep.subr.bf16.mxu0 0
        %1426 = vmatpush1.bf16.msra.mxu0 %v1368
        %1427 = vmatprep.subr.bf16.mxu0 0
        %1428 = vmatpush2.bf16.msra.mxu0 0
        %1429 = vmatprep.subr.bf16.mxu0 0
        %1430 = vmatpush2.bf16.msra.mxu0 0
        %1431 = vmatprep.subr.bf16.mxu0 0
        %1432 = vmatpush2.bf16.msra.mxu0 0
        %1433 = vmatprep.subr.bf16.mxu0 0
        %1434 = vmatpush2.bf16.msra.mxu0 0
        %1435 = vmatprep.subr.bf16.mxu0 0
        %1436 = vmatpush2.bf16.msra.mxu0 0
        %1437 = vmatprep.subr.bf16.mxu0 0
        %1438 = vmatpush2.bf16.msra.mxu0 0
        %1439 = vmatprep.subr.bf16.mxu0 0
        %1440 = vmatpush2.bf16.msra.mxu0 0
        %1441 = vmatprep.subr.bf16.mxu0 0
        %1442 = vmatpush2.bf16.msra.mxu0 0
        %1443 = vmatprep.mubr.bf16.mxu0 0
        %1444 = vmatmul.mubr.bf16.gmra.mxu0 %v1358
        %v1445 = vpop.f32.mrf.mxu0
        %v1446 = vadd.f32 0.0, %v1445
        %v1447 = vpop.f32.mrf.mxu0
        %v1448 = vpop.f32.mrf.mxu0
        %v1449 = vpop.f32.mrf.mxu0
        %1450 = vdwg.mxu0
        %v1452 = vsel %vm1356, %v1335, 0
        %v1455 = vsel %vm1360, %v1345, 0
        %v1458 = vsel %vm1360, %v1346, 0
        %v1461 = vsel %vm1360, %v1347, 0
        %1463 = vmatprep.subr.bf16.mxu0 0
        %1464 = vmatpush1.bf16.msra.mxu0 0
        %1465 = vmatprep.subr.bf16.mxu0 0
        %1466 = vmatpush1.bf16.msra.mxu0 0
        %1467 = vmatprep.subr.bf16.mxu0 0
        %1468 = vmatpush1.bf16.msra.mxu0 0
        %1469 = vmatprep.subr.bf16.mxu0 0
        %1470 = vmatpush1.bf16.msra.mxu0 0
        %1471 = vmatprep.subr.bf16.mxu0 0
        %1472 = vmatpush1.bf16.msra.mxu0 0
        %1473 = vmatprep.subr.bf16.mxu0 0
        %1474 = vmatpush1.bf16.msra.mxu0 0
        %1475 = vmatprep.subr.bf16.mxu0 0
        %1476 = vmatpush1.bf16.msra.mxu0 0
        %1477 = vmatprep.subr.bf16.mxu0 %v1458
        %1478 = vmatpush1.bf16.msra.mxu0 %v1455
        %1479 = vmatprep.subr.bf16.mxu0 0
        %1480 = vmatpush2.bf16.msra.mxu0 0
        %1481 = vmatprep.subr.bf16.mxu0 0
        %1482 = vmatpush2.bf16.msra.mxu0 0
        %1483 = vmatprep.subr.bf16.mxu0 0
        %1484 = vmatpush2.bf16.msra.mxu0 0
        %1485 = vmatprep.subr.bf16.mxu0 0
        %1486 = vmatpush2.bf16.msra.mxu0 0
        %1487 = vmatprep.subr.bf16.mxu0 0
        %1488 = vmatpush2.bf16.msra.mxu0 0
        %1489 = vmatprep.subr.bf16.mxu0 0
        %1490 = vmatpush2.bf16.msra.mxu0 0
        %1491 = vmatprep.subr.bf16.mxu0 0
        %1492 = vmatpush2.bf16.msra.mxu0 0
        %1493 = vmatprep.subr.bf16.mxu0 0
        %1494 = vmatpush2.bf16.msra.mxu0 0
        %1495 = vmatprep.mubr.bf16.mxu0 0
        %1496 = vmatmul.mubr.bf16.gmra.mxu0 %v1452
        %v1497 = vpop.f32.mrf.mxu0
        %v1498 = vadd.f32 %v1405, %v1497
        %v1499 = vpop.f32.mrf.mxu0
        %v1500 = vadd.f32 %v1407, %v1499
        %v1501 = vpop.f32.mrf.mxu0
        %v1502 = vpop.f32.mrf.mxu0
        %1503 = vdwg.mxu0
        %1504 = vmatprep.subr.bf16.mxu0 0
        %1505 = vmatpush1.bf16.msra.mxu0 0
        %1506 = vmatprep.subr.bf16.mxu0 0
        %1507 = vmatpush1.bf16.msra.mxu0 0
        %1508 = vmatprep.subr.bf16.mxu0 0
        %1509 = vmatpush1.bf16.msra.mxu0 0
        %1510 = vmatprep.subr.bf16.mxu0 0
        %1511 = vmatpush1.bf16.msra.mxu0 0
        %1512 = vmatprep.subr.bf16.mxu0 0
        %1513 = vmatpush1.bf16.msra.mxu0 0
        %1514 = vmatprep.subr.bf16.mxu0 0
        %1515 = vmatpush1.bf16.msra.mxu0 0
        %1516 = vmatprep.subr.bf16.mxu0 0
        %1517 = vmatpush1.bf16.msra.mxu0 0
        %1518 = vmatprep.subr.bf16.mxu0 0
        %1519 = vmatpush1.bf16.msra.mxu0 %v1461
        %1520 = vmatprep.subr.bf16.mxu0 0
        %1521 = vmatpush2.bf16.msra.mxu0 0
        %1522 = vmatprep.subr.bf16.mxu0 0
        %1523 = vmatpush2.bf16.msra.mxu0 0
        %1524 = vmatprep.subr.bf16.mxu0 0
        %1525 = vmatpush2.bf16.msra.mxu0 0
        %1526 = vmatprep.subr.bf16.mxu0 0
        %1527 = vmatpush2.bf16.msra.mxu0 0
        %1528 = vmatprep.subr.bf16.mxu0 0
        %1529 = vmatpush2.bf16.msra.mxu0 0
        %1530 = vmatprep.subr.bf16.mxu0 0
        %1531 = vmatpush2.bf16.msra.mxu0 0
        %1532 = vmatprep.subr.bf16.mxu0 0
        %1533 = vmatpush2.bf16.msra.mxu0 0
        %1534 = vmatprep.subr.bf16.mxu0 0
        %1535 = vmatpush2.bf16.msra.mxu0 0
        %1536 = vmatprep.mubr.bf16.mxu0 0
        %1537 = vmatmul.mubr.bf16.gmra.mxu0 %v1452
        %v1538 = vpop.f32.mrf.mxu0
        %v1539 = vadd.f32 %v1446, %v1538
        %v1540 = vpop.f32.mrf.mxu0
        %v1541 = vpop.f32.mrf.mxu0
        %v1542 = vpop.f32.mrf.mxu0
        %1543 = vdwg.mxu0
        %s1544 = scalar_lea.vmem %s4, 8
        %v1545 = vld [vmem:[%s1544] sm:$0xf]
        %1546 = vrot.lane.b32.xlu0 %v1345, 126
        %v1547 = vpop.permute.xlu0 %1546
        %1548 = vrot.lane.b32.xlu0 %v1346, 126
        %v1549 = vpop.permute.xlu0 %1548
        %1550 = vrot.lane.b32.xlu0 %v1347, 126
        %v1551 = vpop.permute.xlu0 %1550
        %v1552 = vsel %vm531, %v1547, %v1549
        %v1553 = vsel %vm531, %v1549, %v1551
        %v1555 = vsel %vm1356, %v1545, 0
        %v1558 = vsel %vm1360, %v1552, 0
        %v1561 = vsel %vm1360, %v1553, 0
        %v1564 = vsel %vm1360, %v1551, 0
        %1566 = vmatprep.subr.bf16.mxu0 0
        %1567 = vmatpush1.bf16.msra.mxu0 0
        %1568 = vmatprep.subr.bf16.mxu0 0
        %1569 = vmatpush1.bf16.msra.mxu0 0
        %1570 = vmatprep.subr.bf16.mxu0 0
        %1571 = vmatpush1.bf16.msra.mxu0 0
        %1572 = vmatprep.subr.bf16.mxu0 0
        %1573 = vmatpush1.bf16.msra.mxu0 0
        %1574 = vmatprep.subr.bf16.mxu0 0
        %1575 = vmatpush1.bf16.msra.mxu0 0
        %1576 = vmatprep.subr.bf16.mxu0 0
        %1577 = vmatpush1.bf16.msra.mxu0 0
        %1578 = vmatprep.subr.bf16.mxu0 0
        %1579 = vmatpush1.bf16.msra.mxu0 0
        %1580 = vmatprep.subr.bf16.mxu0 %v1561
        %1581 = vmatpush1.bf16.msra.mxu0 %v1558
        %1582 = vmatprep.subr.bf16.mxu0 0
        %1583 = vmatpush2.bf16.msra.mxu0 0
        %1584 = vmatprep.subr.bf16.mxu0 0
        %1585 = vmatpush2.bf16.msra.mxu0 0
        %1586 = vmatprep.subr.bf16.mxu0 0
        %1587 = vmatpush2.bf16.msra.mxu0 0
        %1588 = vmatprep.subr.bf16.mxu0 0
        %1589 = vmatpush2.bf16.msra.mxu0 0
        %1590 = vmatprep.subr.bf16.mxu0 0
        %1591 = vmatpush2.bf16.msra.mxu0 0
        %1592 = vmatprep.subr.bf16.mxu0 0
        %1593 = vmatpush2.bf16.msra.mxu0 0
        %1594 = vmatprep.subr.bf16.mxu0 0
        %1595 = vmatpush2.bf16.msra.mxu0 0
        %1596 = vmatprep.subr.bf16.mxu0 0
        %1597 = vmatpush2.bf16.msra.mxu0 0
        %1598 = vmatprep.mubr.bf16.mxu0 0
        %1599 = vmatmul.mubr.bf16.gmra.mxu0 %v1555
        %v1600 = vpop.f32.mrf.mxu0
        %v1601 = vadd.f32 0.0, %v1600
        %v1602 = vpop.f32.mrf.mxu0
        %v1603 = vadd.f32 0.0, %v1602
        %v1604 = vpop.f32.mrf.mxu0
        %v1605 = vpop.f32.mrf.mxu0
        %1606 = vdwg.mxu0
        %1607 = vmatprep.subr.bf16.mxu0 0
        %1608 = vmatpush1.bf16.msra.mxu0 0
        %1609 = vmatprep.subr.bf16.mxu0 0
        %1610 = vmatpush1.bf16.msra.mxu0 0
        %1611 = vmatprep.subr.bf16.mxu0 0
        %1612 = vmatpush1.bf16.msra.mxu0 0
        %1613 = vmatprep.subr.bf16.mxu0 0
        %1614 = vmatpush1.bf16.msra.mxu0 0
        %1615 = vmatprep.subr.bf16.mxu0 0
        %1616 = vmatpush1.bf16.msra.mxu0 0
        %1617 = vmatprep.subr.bf16.mxu0 0
        %1618 = vmatpush1.bf16.msra.mxu0 0
        %1619 = vmatprep.subr.bf16.mxu0 0
        %1620 = vmatpush1.bf16.msra.mxu0 0
        %1621 = vmatprep.subr.bf16.mxu0 0
        %1622 = vmatpush1.bf16.msra.mxu0 %v1564
        %1623 = vmatprep.subr.bf16.mxu0 0
        %1624 = vmatpush2.bf16.msra.mxu0 0
        %1625 = vmatprep.subr.bf16.mxu0 0
        %1626 = vmatpush2.bf16.msra.mxu0 0
        %1627 = vmatprep.subr.bf16.mxu0 0
        %1628 = vmatpush2.bf16.msra.mxu0 0
        %1629 = vmatprep.subr.bf16.mxu0 0
        %1630 = vmatpush2.bf16.msra.mxu0 0
        %1631 = vmatprep.subr.bf16.mxu0 0
        %1632 = vmatpush2.bf16.msra.mxu0 0
        %1633 = vmatprep.subr.bf16.mxu0 0
        %1634 = vmatpush2.bf16.msra.mxu0 0
        %1635 = vmatprep.subr.bf16.mxu0 0
        %1636 = vmatpush2.bf16.msra.mxu0 0
        %1637 = vmatprep.subr.bf16.mxu0 0
        %1638 = vmatpush2.bf16.msra.mxu0 0
        %1639 = vmatprep.mubr.bf16.mxu0 0
        %1640 = vmatmul.mubr.bf16.gmra.mxu0 %v1555
        %v1641 = vpop.f32.mrf.mxu0
        %v1642 = vadd.f32 0.0, %v1641
        %v1643 = vpop.f32.mrf.mxu0
        %v1644 = vpop.f32.mrf.mxu0
        %v1645 = vpop.f32.mrf.mxu0
        %1646 = vdwg.mxu0
        %v1647 = vadd.f32 %v1498, %v1601
        %v1648 = vadd.f32 %v1500, %v1603
        %v1649 = vadd.f32 %v1539, %v1642
        %s1650 = scalar_lea.vmem %s4, 12
        %v1651 = vld [vmem:[%s1650] sm:$0xf]
        %1652 = vrot.lane.b32.xlu0 %v1345, 110
        %v1653 = vpop.permute.xlu0 %1652
        %1654 = vrot.lane.b32.xlu0 %v1346, 110
        %v1655 = vpop.permute.xlu0 %1654
        %1656 = vrot.lane.b32.xlu0 %v1347, 110
        %v1657 = vpop.permute.xlu0 %1656
        %v1658 = vsel %vm638, %v1653, %v1655
        %v1659 = vsel %vm638, %v1655, %v1657
        %v1661 = vsel %vm1356, %v1651, 0
        %v1664 = vsel %vm1360, %v1658, 0
        %v1667 = vsel %vm1360, %v1659, 0
        %v1670 = vsel %vm1360, %v1657, 0
        %1672 = vmatprep.subr.bf16.mxu0 0
        %1673 = vmatpush1.bf16.msra.mxu0 0
        %1674 = vmatprep.subr.bf16.mxu0 0
        %1675 = vmatpush1.bf16.msra.mxu0 0
        %1676 = vmatprep.subr.bf16.mxu0 0
        %1677 = vmatpush1.bf16.msra.mxu0 0
        %1678 = vmatprep.subr.bf16.mxu0 0
        %1679 = vmatpush1.bf16.msra.mxu0 0
        %1680 = vmatprep.subr.bf16.mxu0 0
        %1681 = vmatpush1.bf16.msra.mxu0 0
        %1682 = vmatprep.subr.bf16.mxu0 0
        %1683 = vmatpush1.bf16.msra.mxu0 0
        %1684 = vmatprep.subr.bf16.mxu0 0
        %1685 = vmatpush1.bf16.msra.mxu0 0
        %1686 = vmatprep.subr.bf16.mxu0 %v1667
        %1687 = vmatpush1.bf16.msra.mxu0 %v1664
        %1688 = vmatprep.subr.bf16.mxu0 0
        %1689 = vmatpush2.bf16.msra.mxu0 0
        %1690 = vmatprep.subr.bf16.mxu0 0
        %1691 = vmatpush2.bf16.msra.mxu0 0
        %1692 = vmatprep.subr.bf16.mxu0 0
        %1693 = vmatpush2.bf16.msra.mxu0 0
        %1694 = vmatprep.subr.bf16.mxu0 0
        %1695 = vmatpush2.bf16.msra.mxu0 0
        %1696 = vmatprep.subr.bf16.mxu0 0
        %1697 = vmatpush2.bf16.msra.mxu0 0
        %1698 = vmatprep.subr.bf16.mxu0 0
        %1699 = vmatpush2.bf16.msra.mxu0 0
        %1700 = vmatprep.subr.bf16.mxu0 0
        %1701 = vmatpush2.bf16.msra.mxu0 0
        %1702 = vmatprep.subr.bf16.mxu0 0
        %1703 = vmatpush2.bf16.msra.mxu0 0
        %1704 = vmatprep.mubr.bf16.mxu0 0
        %1705 = vmatmul.mubr.bf16.gmra.mxu0 %v1661
        %v1706 = vpop.f32.mrf.mxu0
        %v1707 = vadd.f32 0.0, %v1706
        %v1708 = vpop.f32.mrf.mxu0
        %v1709 = vadd.f32 0.0, %v1708
        %v1710 = vpop.f32.mrf.mxu0
        %v1711 = vpop.f32.mrf.mxu0
        %1712 = vdwg.mxu0
        %1713 = vmatprep.subr.bf16.mxu0 0
        %1714 = vmatpush1.bf16.msra.mxu0 0
        %1715 = vmatprep.subr.bf16.mxu0 0
        %1716 = vmatpush1.bf16.msra.mxu0 0
        %1717 = vmatprep.subr.bf16.mxu0 0
        %1718 = vmatpush1.bf16.msra.mxu0 0
        %1719 = vmatprep.subr.bf16.mxu0 0
        %1720 = vmatpush1.bf16.msra.mxu0 0
        %1721 = vmatprep.subr.bf16.mxu0 0
        %1722 = vmatpush1.bf16.msra.mxu0 0
        %1723 = vmatprep.subr.bf16.mxu0 0
        %1724 = vmatpush1.bf16.msra.mxu0 0
        %1725 = vmatprep.subr.bf16.mxu0 0
        %1726 = vmatpush1.bf16.msra.mxu0 0
        %1727 = vmatprep.subr.bf16.mxu0 0
        %1728 = vmatpush1.bf16.msra.mxu0 %v1670
        %1729 = vmatprep.subr.bf16.mxu0 0
        %1730 = vmatpush2.bf16.msra.mxu0 0
        %1731 = vmatprep.subr.bf16.mxu0 0
        %1732 = vmatpush2.bf16.msra.mxu0 0
        %1733 = vmatprep.subr.bf16.mxu0 0
        %1734 = vmatpush2.bf16.msra.mxu0 0
        %1735 = vmatprep.subr.bf16.mxu0 0
        %1736 = vmatpush2.bf16.msra.mxu0 0
        %1737 = vmatprep.subr.bf16.mxu0 0
        %1738 = vmatpush2.bf16.msra.mxu0 0
        %1739 = vmatprep.subr.bf16.mxu0 0
        %1740 = vmatpush2.bf16.msra.mxu0 0
        %1741 = vmatprep.subr.bf16.mxu0 0
        %1742 = vmatpush2.bf16.msra.mxu0 0
        %1743 = vmatprep.subr.bf16.mxu0 0
        %1744 = vmatpush2.bf16.msra.mxu0 0
        %1745 = vmatprep.mubr.bf16.mxu0 0
        %1746 = vmatmul.mubr.bf16.gmra.mxu0 %v1661
        %v1747 = vpop.f32.mrf.mxu0
        %v1748 = vadd.f32 0.0, %v1747
        %v1749 = vpop.f32.mrf.mxu0
        %v1750 = vpop.f32.mrf.mxu0
        %v1751 = vpop.f32.mrf.mxu0
        %1752 = vdwg.mxu0
        %v1753 = vadd.f32 %v1647, %v1707
        %v1754 = vadd.f32 %v1648, %v1709
        %v1755 = vadd.f32 %v1649, %v1748
        %s1756 = scalar_lea.vmem %s4, 16
        %v1757 = vld [vmem:[%s1756] sm:$0xf]
        %1758 = vrot.lane.b32.xlu0 %v1345, 109
        %v1759 = vpop.permute.xlu0 %1758
        %1760 = vrot.lane.b32.xlu0 %v1346, 109
        %v1761 = vpop.permute.xlu0 %1760
        %1762 = vrot.lane.b32.xlu0 %v1347, 109
        %v1763 = vpop.permute.xlu0 %1762
        %v1764 = vsel %vm745, %v1759, %v1761
        %v1765 = vsel %vm745, %v1761, %v1763
        %v1767 = vsel %vm1356, %v1757, 0
        %v1770 = vsel %vm1360, %v1764, 0
        %v1773 = vsel %vm1360, %v1765, 0
        %v1776 = vsel %vm1360, %v1763, 0
        %1778 = vmatprep.subr.bf16.mxu0 0
        %1779 = vmatpush1.bf16.msra.mxu0 0
        %1780 = vmatprep.subr.bf16.mxu0 0
        %1781 = vmatpush1.bf16.msra.mxu0 0
        %1782 = vmatprep.subr.bf16.mxu0 0
        %1783 = vmatpush1.bf16.msra.mxu0 0
        %1784 = vmatprep.subr.bf16.mxu0 0
        %1785 = vmatpush1.bf16.msra.mxu0 0
        %1786 = vmatprep.subr.bf16.mxu0 0
        %1787 = vmatpush1.bf16.msra.mxu0 0
        %1788 = vmatprep.subr.bf16.mxu0 0
        %1789 = vmatpush1.bf16.msra.mxu0 0
        %1790 = vmatprep.subr.bf16.mxu0 0
        %1791 = vmatpush1.bf16.msra.mxu0 0
        %1792 = vmatprep.subr.bf16.mxu0 %v1773
        %1793 = vmatpush1.bf16.msra.mxu0 %v1770
        %1794 = vmatprep.subr.bf16.mxu0 0
        %1795 = vmatpush2.bf16.msra.mxu0 0
        %1796 = vmatprep.subr.bf16.mxu0 0
        %1797 = vmatpush2.bf16.msra.mxu0 0
        %1798 = vmatprep.subr.bf16.mxu0 0
        %1799 = vmatpush2.bf16.msra.mxu0 0
        %1800 = vmatprep.subr.bf16.mxu0 0
        %1801 = vmatpush2.bf16.msra.mxu0 0
        %1802 = vmatprep.subr.bf16.mxu0 0
        %1803 = vmatpush2.bf16.msra.mxu0 0
        %1804 = vmatprep.subr.bf16.mxu0 0
        %1805 = vmatpush2.bf16.msra.mxu0 0
        %1806 = vmatprep.subr.bf16.mxu0 0
        %1807 = vmatpush2.bf16.msra.mxu0 0
        %1808 = vmatprep.subr.bf16.mxu0 0
        %1809 = vmatpush2.bf16.msra.mxu0 0
        %1810 = vmatprep.mubr.bf16.mxu0 0
        %1811 = vmatmul.mubr.bf16.gmra.mxu0 %v1767
        %v1812 = vpop.f32.mrf.mxu0
        %v1813 = vadd.f32 0.0, %v1812
        %v1814 = vpop.f32.mrf.mxu0
        %v1815 = vadd.f32 0.0, %v1814
        %v1816 = vpop.f32.mrf.mxu0
        %v1817 = vpop.f32.mrf.mxu0
        %1818 = vdwg.mxu0
        %1819 = vmatprep.subr.bf16.mxu0 0
        %1820 = vmatpush1.bf16.msra.mxu0 0
        %1821 = vmatprep.subr.bf16.mxu0 0
        %1822 = vmatpush1.bf16.msra.mxu0 0
        %1823 = vmatprep.subr.bf16.mxu0 0
        %1824 = vmatpush1.bf16.msra.mxu0 0
        %1825 = vmatprep.subr.bf16.mxu0 0
        %1826 = vmatpush1.bf16.msra.mxu0 0
        %1827 = vmatprep.subr.bf16.mxu0 0
        %1828 = vmatpush1.bf16.msra.mxu0 0
        %1829 = vmatprep.subr.bf16.mxu0 0
        %1830 = vmatpush1.bf16.msra.mxu0 0
        %1831 = vmatprep.subr.bf16.mxu0 0
        %1832 = vmatpush1.bf16.msra.mxu0 0
        %1833 = vmatprep.subr.bf16.mxu0 0
        %1834 = vmatpush1.bf16.msra.mxu0 %v1776
        %1835 = vmatprep.subr.bf16.mxu0 0
        %1836 = vmatpush2.bf16.msra.mxu0 0
        %1837 = vmatprep.subr.bf16.mxu0 0
        %1838 = vmatpush2.bf16.msra.mxu0 0
        %1839 = vmatprep.subr.bf16.mxu0 0
        %1840 = vmatpush2.bf16.msra.mxu0 0
        %1841 = vmatprep.subr.bf16.mxu0 0
        %1842 = vmatpush2.bf16.msra.mxu0 0
        %1843 = vmatprep.subr.bf16.mxu0 0
        %1844 = vmatpush2.bf16.msra.mxu0 0
        %1845 = vmatprep.subr.bf16.mxu0 0
        %1846 = vmatpush2.bf16.msra.mxu0 0
        %1847 = vmatprep.subr.bf16.mxu0 0
        %1848 = vmatpush2.bf16.msra.mxu0 0
        %1849 = vmatprep.subr.bf16.mxu0 0
        %1850 = vmatpush2.bf16.msra.mxu0 0
        %1851 = vmatprep.mubr.bf16.mxu0 0
        %1852 = vmatmul.mubr.bf16.gmra.mxu0 %v1767
        %v1853 = vpop.f32.mrf.mxu0
        %v1854 = vadd.f32 0.0, %v1853
        %v1855 = vpop.f32.mrf.mxu0
        %v1856 = vpop.f32.mrf.mxu0
        %v1857 = vpop.f32.mrf.mxu0
        %1858 = vdwg.mxu0
        %v1859 = vadd.f32 %v1753, %v1813
        %v1860 = vadd.f32 %v1754, %v1815
        %v1861 = vadd.f32 %v1755, %v1854
        %s1862 = scalar_lea.vmem %s4, 20
        %v1863 = vld [vmem:[%s1862] sm:$0xf]
        %1864 = vrot.lane.b32.xlu0 %v1345, 108
        %v1865 = vpop.permute.xlu0 %1864
        %1866 = vrot.lane.b32.xlu0 %v1346, 108
        %v1867 = vpop.permute.xlu0 %1866
        %1868 = vrot.lane.b32.xlu0 %v1347, 108
        %v1869 = vpop.permute.xlu0 %1868
        %v1870 = vsel %vm852, %v1865, %v1867
        %v1871 = vsel %vm852, %v1867, %v1869
        %v1873 = vsel %vm1356, %v1863, 0
        %v1876 = vsel %vm1360, %v1870, 0
        %v1879 = vsel %vm1360, %v1871, 0
        %v1882 = vsel %vm1360, %v1869, 0
        %1884 = vmatprep.subr.bf16.mxu0 0
        %1885 = vmatpush1.bf16.msra.mxu0 0
        %1886 = vmatprep.subr.bf16.mxu0 0
        %1887 = vmatpush1.bf16.msra.mxu0 0
        %1888 = vmatprep.subr.bf16.mxu0 0
        %1889 = vmatpush1.bf16.msra.mxu0 0
        %1890 = vmatprep.subr.bf16.mxu0 0
        %1891 = vmatpush1.bf16.msra.mxu0 0
        %1892 = vmatprep.subr.bf16.mxu0 0
        %1893 = vmatpush1.bf16.msra.mxu0 0
        %1894 = vmatprep.subr.bf16.mxu0 0
        %1895 = vmatpush1.bf16.msra.mxu0 0
        %1896 = vmatprep.subr.bf16.mxu0 0
        %1897 = vmatpush1.bf16.msra.mxu0 0
        %1898 = vmatprep.subr.bf16.mxu0 %v1879
        %1899 = vmatpush1.bf16.msra.mxu0 %v1876
        %1900 = vmatprep.subr.bf16.mxu0 0
        %1901 = vmatpush2.bf16.msra.mxu0 0
        %1902 = vmatprep.subr.bf16.mxu0 0
        %1903 = vmatpush2.bf16.msra.mxu0 0
        %1904 = vmatprep.subr.bf16.mxu0 0
        %1905 = vmatpush2.bf16.msra.mxu0 0
        %1906 = vmatprep.subr.bf16.mxu0 0
        %1907 = vmatpush2.bf16.msra.mxu0 0
        %1908 = vmatprep.subr.bf16.mxu0 0
        %1909 = vmatpush2.bf16.msra.mxu0 0
        %1910 = vmatprep.subr.bf16.mxu0 0
        %1911 = vmatpush2.bf16.msra.mxu0 0
        %1912 = vmatprep.subr.bf16.mxu0 0
        %1913 = vmatpush2.bf16.msra.mxu0 0
        %1914 = vmatprep.subr.bf16.mxu0 0
        %1915 = vmatpush2.bf16.msra.mxu0 0
        %1916 = vmatprep.mubr.bf16.mxu0 0
        %1917 = vmatmul.mubr.bf16.gmra.mxu0 %v1873
        %v1918 = vpop.f32.mrf.mxu0
        %v1919 = vadd.f32 0.0, %v1918
        %v1920 = vpop.f32.mrf.mxu0
        %v1921 = vadd.f32 0.0, %v1920
        %v1922 = vpop.f32.mrf.mxu0
        %v1923 = vpop.f32.mrf.mxu0
        %1924 = vdwg.mxu0
        %1925 = vmatprep.subr.bf16.mxu0 0
        %1926 = vmatpush1.bf16.msra.mxu0 0
        %1927 = vmatprep.subr.bf16.mxu0 0
        %1928 = vmatpush1.bf16.msra.mxu0 0
        %1929 = vmatprep.subr.bf16.mxu0 0
        %1930 = vmatpush1.bf16.msra.mxu0 0
        %1931 = vmatprep.subr.bf16.mxu0 0
        %1932 = vmatpush1.bf16.msra.mxu0 0
        %1933 = vmatprep.subr.bf16.mxu0 0
        %1934 = vmatpush1.bf16.msra.mxu0 0
        %1935 = vmatprep.subr.bf16.mxu0 0
        %1936 = vmatpush1.bf16.msra.mxu0 0
        %1937 = vmatprep.subr.bf16.mxu0 0
        %1938 = vmatpush1.bf16.msra.mxu0 0
        %1939 = vmatprep.subr.bf16.mxu0 0
        %1940 = vmatpush1.bf16.msra.mxu0 %v1882
        %1941 = vmatprep.subr.bf16.mxu0 0
        %1942 = vmatpush2.bf16.msra.mxu0 0
        %1943 = vmatprep.subr.bf16.mxu0 0
        %1944 = vmatpush2.bf16.msra.mxu0 0
        %1945 = vmatprep.subr.bf16.mxu0 0
        %1946 = vmatpush2.bf16.msra.mxu0 0
        %1947 = vmatprep.subr.bf16.mxu0 0
        %1948 = vmatpush2.bf16.msra.mxu0 0
        %1949 = vmatprep.subr.bf16.mxu0 0
        %1950 = vmatpush2.bf16.msra.mxu0 0
        %1951 = vmatprep.subr.bf16.mxu0 0
        %1952 = vmatpush2.bf16.msra.mxu0 0
        %1953 = vmatprep.subr.bf16.mxu0 0
        %1954 = vmatpush2.bf16.msra.mxu0 0
        %1955 = vmatprep.subr.bf16.mxu0 0
        %1956 = vmatpush2.bf16.msra.mxu0 0
        %1957 = vmatprep.mubr.bf16.mxu0 0
        %1958 = vmatmul.mubr.bf16.gmra.mxu0 %v1873
        %v1959 = vpop.f32.mrf.mxu0
        %v1960 = vadd.f32 0.0, %v1959
        %v1961 = vpop.f32.mrf.mxu0
        %v1962 = vpop.f32.mrf.mxu0
        %v1963 = vpop.f32.mrf.mxu0
        %1964 = vdwg.mxu0
        %v1965 = vadd.f32 %v1859, %v1919
        %v1966 = vadd.f32 %v1860, %v1921
        %v1967 = vadd.f32 %v1861, %v1960
        %s1968 = scalar_lea.vmem %s4, 24
        %v1969 = vld [vmem:[%s1968] sm:$0xf]
        %1970 = vrot.lane.b32.xlu0 %v1345, 92
        %v1971 = vpop.permute.xlu0 %1970
        %1972 = vrot.lane.b32.xlu0 %v1346, 92
        %v1973 = vpop.permute.xlu0 %1972
        %1974 = vrot.lane.b32.xlu0 %v1347, 92
        %v1975 = vpop.permute.xlu0 %1974
        %v1976 = vsel %vm959, %v1971, %v1973
        %v1977 = vsel %vm959, %v1973, %v1975
        %v1979 = vsel %vm1356, %v1969, 0
        %v1982 = vsel %vm1360, %v1976, 0
        %v1985 = vsel %vm1360, %v1977, 0
        %v1988 = vsel %vm1360, %v1975, 0
        %1990 = vmatprep.subr.bf16.mxu0 0
        %1991 = vmatpush1.bf16.msra.mxu0 0
        %1992 = vmatprep.subr.bf16.mxu0 0
        %1993 = vmatpush1.bf16.msra.mxu0 0
        %1994 = vmatprep.subr.bf16.mxu0 0
        %1995 = vmatpush1.bf16.msra.mxu0 0
        %1996 = vmatprep.subr.bf16.mxu0 0
        %1997 = vmatpush1.bf16.msra.mxu0 0
        %1998 = vmatprep.subr.bf16.mxu0 0
        %1999 = vmatpush1.bf16.msra.mxu0 0
        %2000 = vmatprep.subr.bf16.mxu0 0
        %2001 = vmatpush1.bf16.msra.mxu0 0
        %2002 = vmatprep.subr.bf16.mxu0 0
        %2003 = vmatpush1.bf16.msra.mxu0 0
        %2004 = vmatprep.subr.bf16.mxu0 %v1985
        %2005 = vmatpush1.bf16.msra.mxu0 %v1982
        %2006 = vmatprep.subr.bf16.mxu0 0
        %2007 = vmatpush2.bf16.msra.mxu0 0
        %2008 = vmatprep.subr.bf16.mxu0 0
        %2009 = vmatpush2.bf16.msra.mxu0 0
        %2010 = vmatprep.subr.bf16.mxu0 0
        %2011 = vmatpush2.bf16.msra.mxu0 0
        %2012 = vmatprep.subr.bf16.mxu0 0
        %2013 = vmatpush2.bf16.msra.mxu0 0
        %2014 = vmatprep.subr.bf16.mxu0 0
        %2015 = vmatpush2.bf16.msra.mxu0 0
        %2016 = vmatprep.subr.bf16.mxu0 0
        %2017 = vmatpush2.bf16.msra.mxu0 0
        %2018 = vmatprep.subr.bf16.mxu0 0
        %2019 = vmatpush2.bf16.msra.mxu0 0
        %2020 = vmatprep.subr.bf16.mxu0 0
        %2021 = vmatpush2.bf16.msra.mxu0 0
        %2022 = vmatprep.mubr.bf16.mxu0 0
        %2023 = vmatmul.mubr.bf16.gmra.mxu0 %v1979
        %v2024 = vpop.f32.mrf.mxu0
        %v2025 = vadd.f32 0.0, %v2024
        %v2026 = vpop.f32.mrf.mxu0
        %v2027 = vadd.f32 0.0, %v2026
        %v2028 = vpop.f32.mrf.mxu0
        %v2029 = vpop.f32.mrf.mxu0
        %2030 = vdwg.mxu0
        %2031 = vmatprep.subr.bf16.mxu0 0
        %2032 = vmatpush1.bf16.msra.mxu0 0
        %2033 = vmatprep.subr.bf16.mxu0 0
        %2034 = vmatpush1.bf16.msra.mxu0 0
        %2035 = vmatprep.subr.bf16.mxu0 0
        %2036 = vmatpush1.bf16.msra.mxu0 0
        %2037 = vmatprep.subr.bf16.mxu0 0
        %2038 = vmatpush1.bf16.msra.mxu0 0
        %2039 = vmatprep.subr.bf16.mxu0 0
        %2040 = vmatpush1.bf16.msra.mxu0 0
        %2041 = vmatprep.subr.bf16.mxu0 0
        %2042 = vmatpush1.bf16.msra.mxu0 0
        %2043 = vmatprep.subr.bf16.mxu0 0
        %2044 = vmatpush1.bf16.msra.mxu0 0
        %2045 = vmatprep.subr.bf16.mxu0 0
        %2046 = vmatpush1.bf16.msra.mxu0 %v1988
        %2047 = vmatprep.subr.bf16.mxu0 0
        %2048 = vmatpush2.bf16.msra.mxu0 0
        %2049 = vmatprep.subr.bf16.mxu0 0
        %2050 = vmatpush2.bf16.msra.mxu0 0
        %2051 = vmatprep.subr.bf16.mxu0 0
        %2052 = vmatpush2.bf16.msra.mxu0 0
        %2053 = vmatprep.subr.bf16.mxu0 0
        %2054 = vmatpush2.bf16.msra.mxu0 0
        %2055 = vmatprep.subr.bf16.mxu0 0
        %2056 = vmatpush2.bf16.msra.mxu0 0
        %2057 = vmatprep.subr.bf16.mxu0 0
        %2058 = vmatpush2.bf16.msra.mxu0 0
        %2059 = vmatprep.subr.bf16.mxu0 0
        %2060 = vmatpush2.bf16.msra.mxu0 0
        %2061 = vmatprep.subr.bf16.mxu0 0
        %2062 = vmatpush2.bf16.msra.mxu0 0
        %2063 = vmatprep.mubr.bf16.mxu0 0
        %2064 = vmatmul.mubr.bf16.gmra.mxu0 %v1979
        %v2065 = vpop.f32.mrf.mxu0
        %v2066 = vadd.f32 0.0, %v2065
        %v2067 = vpop.f32.mrf.mxu0
        %v2068 = vpop.f32.mrf.mxu0
        %v2069 = vpop.f32.mrf.mxu0
        %2070 = vdwg.mxu0
        %v2071 = vadd.f32 %v1965, %v2025
        %v2072 = vadd.f32 %v1966, %v2027
        %v2073 = vadd.f32 %v1967, %v2066
        %s2074 = scalar_lea.vmem %s4, 28
        %v2075 = vld [vmem:[%s2074] sm:$0xf]
        %2076 = vrot.lane.b32.xlu0 %v1345, 91
        %v2077 = vpop.permute.xlu0 %2076
        %2078 = vrot.lane.b32.xlu0 %v1346, 91
        %v2079 = vpop.permute.xlu0 %2078
        %2080 = vrot.lane.b32.xlu0 %v1347, 91
        %v2081 = vpop.permute.xlu0 %2080
        %v2082 = vsel %vm1066, %v2077, %v2079
        %v2083 = vsel %vm1066, %v2079, %v2081
        %v2085 = vsel %vm1356, %v2075, 0
        %v2088 = vsel %vm1360, %v2082, 0
        %v2091 = vsel %vm1360, %v2083, 0
        %v2094 = vsel %vm1360, %v2081, 0
        %2096 = vmatprep.subr.bf16.mxu0 0
        %2097 = vmatpush1.bf16.msra.mxu0 0
        %2098 = vmatprep.subr.bf16.mxu0 0
        %2099 = vmatpush1.bf16.msra.mxu0 0
        %2100 = vmatprep.subr.bf16.mxu0 0
        %2101 = vmatpush1.bf16.msra.mxu0 0
        %2102 = vmatprep.subr.bf16.mxu0 0
        %2103 = vmatpush1.bf16.msra.mxu0 0
        %2104 = vmatprep.subr.bf16.mxu0 0
        %2105 = vmatpush1.bf16.msra.mxu0 0
        %2106 = vmatprep.subr.bf16.mxu0 0
        %2107 = vmatpush1.bf16.msra.mxu0 0
        %2108 = vmatprep.subr.bf16.mxu0 0
        %2109 = vmatpush1.bf16.msra.mxu0 0
        %2110 = vmatprep.subr.bf16.mxu0 %v2091
        %2111 = vmatpush1.bf16.msra.mxu0 %v2088
        %2112 = vmatprep.subr.bf16.mxu0 0
        %2113 = vmatpush2.bf16.msra.mxu0 0
        %2114 = vmatprep.subr.bf16.mxu0 0
        %2115 = vmatpush2.bf16.msra.mxu0 0
        %2116 = vmatprep.subr.bf16.mxu0 0
        %2117 = vmatpush2.bf16.msra.mxu0 0
        %2118 = vmatprep.subr.bf16.mxu0 0
        %2119 = vmatpush2.bf16.msra.mxu0 0
        %2120 = vmatprep.subr.bf16.mxu0 0
        %2121 = vmatpush2.bf16.msra.mxu0 0
        %2122 = vmatprep.subr.bf16.mxu0 0
        %2123 = vmatpush2.bf16.msra.mxu0 0
        %2124 = vmatprep.subr.bf16.mxu0 0
        %2125 = vmatpush2.bf16.msra.mxu0 0
        %2126 = vmatprep.subr.bf16.mxu0 0
        %2127 = vmatpush2.bf16.msra.mxu0 0
        %2128 = vmatprep.mubr.bf16.mxu0 0
        %2129 = vmatmul.mubr.bf16.gmra.mxu0 %v2085
        %v2130 = vpop.f32.mrf.mxu0
        %v2131 = vadd.f32 0.0, %v2130
        %v2132 = vpop.f32.mrf.mxu0
        %v2133 = vadd.f32 0.0, %v2132
        %v2134 = vpop.f32.mrf.mxu0
        %v2135 = vpop.f32.mrf.mxu0
        %2136 = vdwg.mxu0
        %2137 = vmatprep.subr.bf16.mxu0 0
        %2138 = vmatpush1.bf16.msra.mxu0 0
        %2139 = vmatprep.subr.bf16.mxu0 0
        %2140 = vmatpush1.bf16.msra.mxu0 0
        %2141 = vmatprep.subr.bf16.mxu0 0
        %2142 = vmatpush1.bf16.msra.mxu0 0
        %2143 = vmatprep.subr.bf16.mxu0 0
        %2144 = vmatpush1.bf16.msra.mxu0 0
        %2145 = vmatprep.subr.bf16.mxu0 0
        %2146 = vmatpush1.bf16.msra.mxu0 0
        %2147 = vmatprep.subr.bf16.mxu0 0
        %2148 = vmatpush1.bf16.msra.mxu0 0
        %2149 = vmatprep.subr.bf16.mxu0 0
        %2150 = vmatpush1.bf16.msra.mxu0 0
        %2151 = vmatprep.subr.bf16.mxu0 0
        %2152 = vmatpush1.bf16.msra.mxu0 %v2094
        %2153 = vmatprep.subr.bf16.mxu0 0
        %2154 = vmatpush2.bf16.msra.mxu0 0
        %2155 = vmatprep.subr.bf16.mxu0 0
        %2156 = vmatpush2.bf16.msra.mxu0 0
        %2157 = vmatprep.subr.bf16.mxu0 0
        %2158 = vmatpush2.bf16.msra.mxu0 0
        %2159 = vmatprep.subr.bf16.mxu0 0
        %2160 = vmatpush2.bf16.msra.mxu0 0
        %2161 = vmatprep.subr.bf16.mxu0 0
        %2162 = vmatpush2.bf16.msra.mxu0 0
        %2163 = vmatprep.subr.bf16.mxu0 0
        %2164 = vmatpush2.bf16.msra.mxu0 0
        %2165 = vmatprep.subr.bf16.mxu0 0
        %2166 = vmatpush2.bf16.msra.mxu0 0
        %2167 = vmatprep.subr.bf16.mxu0 0
        %2168 = vmatpush2.bf16.msra.mxu0 0
        %2169 = vmatprep.mubr.bf16.mxu0 0
        %2170 = vmatmul.mubr.bf16.gmra.mxu0 %v2085
        %v2171 = vpop.f32.mrf.mxu0
        %v2172 = vadd.f32 0.0, %v2171
        %v2173 = vpop.f32.mrf.mxu0
        %v2174 = vpop.f32.mrf.mxu0
        %v2175 = vpop.f32.mrf.mxu0
        %2176 = vdwg.mxu0
        %v2177 = vadd.f32 %v2071, %v2131
        %v2178 = vadd.f32 %v2072, %v2133
        %v2179 = vadd.f32 %v2073, %v2172
        %s2180 = scalar_lea.vmem %s4, 32
        %v2181 = vld [vmem:[%s2180] sm:$0xf]
        %2182 = vrot.lane.b32.xlu0 %v1345, 90
        %v2183 = vpop.permute.xlu0 %2182
        %2184 = vrot.lane.b32.xlu0 %v1346, 90
        %v2185 = vpop.permute.xlu0 %2184
        %2186 = vrot.lane.b32.xlu0 %v1347, 90
        %v2187 = vpop.permute.xlu0 %2186
        %v2188 = vsel %vm1173, %v2183, %v2185
        %v2189 = vsel %vm1173, %v2185, %v2187
        %v2191 = vsel %vm1356, %v2181, 0
        %v2194 = vsel %vm1360, %v2188, 0
        %v2197 = vsel %vm1360, %v2189, 0
        %v2200 = vsel %vm1360, %v2187, 0
        %2202 = vmatprep.subr.bf16.mxu0 0
        %2203 = vmatpush1.bf16.msra.mxu0 0
        %2204 = vmatprep.subr.bf16.mxu0 0
        %2205 = vmatpush1.bf16.msra.mxu0 0
        %2206 = vmatprep.subr.bf16.mxu0 0
        %2207 = vmatpush1.bf16.msra.mxu0 0
        %2208 = vmatprep.subr.bf16.mxu0 0
        %2209 = vmatpush1.bf16.msra.mxu0 0
        %2210 = vmatprep.subr.bf16.mxu0 0
        %2211 = vmatpush1.bf16.msra.mxu0 0
        %2212 = vmatprep.subr.bf16.mxu0 0
        %2213 = vmatpush1.bf16.msra.mxu0 0
        %2214 = vmatprep.subr.bf16.mxu0 0
        %2215 = vmatpush1.bf16.msra.mxu0 0
        %2216 = vmatprep.subr.bf16.mxu0 %v2197
        %2217 = vmatpush1.bf16.msra.mxu0 %v2194
        %2218 = vmatprep.subr.bf16.mxu0 0
        %2219 = vmatpush2.bf16.msra.mxu0 0
        %2220 = vmatprep.subr.bf16.mxu0 0
        %2221 = vmatpush2.bf16.msra.mxu0 0
        %2222 = vmatprep.subr.bf16.mxu0 0
        %2223 = vmatpush2.bf16.msra.mxu0 0
        %2224 = vmatprep.subr.bf16.mxu0 0
        %2225 = vmatpush2.bf16.msra.mxu0 0
        %2226 = vmatprep.subr.bf16.mxu0 0
        %2227 = vmatpush2.bf16.msra.mxu0 0
        %2228 = vmatprep.subr.bf16.mxu0 0
        %2229 = vmatpush2.bf16.msra.mxu0 0
        %2230 = vmatprep.subr.bf16.mxu0 0
        %2231 = vmatpush2.bf16.msra.mxu0 0
        %2232 = vmatprep.subr.bf16.mxu0 0
        %2233 = vmatpush2.bf16.msra.mxu0 0
        %2234 = vmatprep.mubr.bf16.mxu0 0
        %2235 = vmatmul.mubr.bf16.gmra.mxu0 %v2191
        %v2236 = vpop.f32.mrf.mxu0
        %v2237 = vadd.f32 0.0, %v2236
        %v2238 = vpop.f32.mrf.mxu0
        %v2239 = vadd.f32 0.0, %v2238
        %v2240 = vpop.f32.mrf.mxu0
        %v2241 = vpop.f32.mrf.mxu0
        %2242 = vdwg.mxu0
        %2243 = vmatprep.subr.bf16.mxu0 0
        %2244 = vmatpush1.bf16.msra.mxu0 0
        %2245 = vmatprep.subr.bf16.mxu0 0
        %2246 = vmatpush1.bf16.msra.mxu0 0
        %2247 = vmatprep.subr.bf16.mxu0 0
        %2248 = vmatpush1.bf16.msra.mxu0 0
        %2249 = vmatprep.subr.bf16.mxu0 0
        %2250 = vmatpush1.bf16.msra.mxu0 0
        %2251 = vmatprep.subr.bf16.mxu0 0
        %2252 = vmatpush1.bf16.msra.mxu0 0
        %2253 = vmatprep.subr.bf16.mxu0 0
        %2254 = vmatpush1.bf16.msra.mxu0 0
        %2255 = vmatprep.subr.bf16.mxu0 0
        %2256 = vmatpush1.bf16.msra.mxu0 0
        %2257 = vmatprep.subr.bf16.mxu0 0
        %2258 = vmatpush1.bf16.msra.mxu0 %v2200
        %2259 = vmatprep.subr.bf16.mxu0 0
        %2260 = vmatpush2.bf16.msra.mxu0 0
        %2261 = vmatprep.subr.bf16.mxu0 0
        %2262 = vmatpush2.bf16.msra.mxu0 0
        %2263 = vmatprep.subr.bf16.mxu0 0
        %2264 = vmatpush2.bf16.msra.mxu0 0
        %2265 = vmatprep.subr.bf16.mxu0 0
        %2266 = vmatpush2.bf16.msra.mxu0 0
        %2267 = vmatprep.subr.bf16.mxu0 0
        %2268 = vmatpush2.bf16.msra.mxu0 0
        %2269 = vmatprep.subr.bf16.mxu0 0
        %2270 = vmatpush2.bf16.msra.mxu0 0
        %2271 = vmatprep.subr.bf16.mxu0 0
        %2272 = vmatpush2.bf16.msra.mxu0 0
        %2273 = vmatprep.subr.bf16.mxu0 0
        %2274 = vmatpush2.bf16.msra.mxu0 0
        %2275 = vmatprep.mubr.bf16.mxu0 0
        %2276 = vmatmul.mubr.bf16.gmra.mxu0 %v2191
        %v2277 = vpop.f32.mrf.mxu0
        %v2278 = vadd.f32 0.0, %v2277
        %v2279 = vpop.f32.mrf.mxu0
        %v2280 = vpop.f32.mrf.mxu0
        %v2281 = vpop.f32.mrf.mxu0
        %2282 = vdwg.mxu0
        %v2283 = vadd.f32 %v2177, %v2237
        %v2284 = vadd.f32 %v2178, %v2239
        %v2285 = vadd.f32 %v2179, %v2278
        %v2286 = vld [vmem:[%s6] sm:$0xf]
        %v2287 = vld [vmem:[%s7] sm:$0xff]
        %2289 = vset.pattern.permute.xlu0 0
        %2290 = vperm.xlu0 %2289, %v2287
        %v2291 = vpop.permute.xlu0 %2290
        %v2294 = vsel %vm335, %v2286, 0
        %2296 = vmatprep.subr.bf16.mxu0 0
        %2297 = vmatpush1.bf16.msra.mxu0 0
        %2298 = vmatprep.subr.bf16.mxu0 0
        %2299 = vmatpush1.bf16.msra.mxu0 0
        %2300 = vmatprep.subr.bf16.mxu0 0
        %2301 = vmatpush1.bf16.msra.mxu0 0
        %2302 = vmatprep.subr.bf16.mxu0 0
        %2303 = vmatpush1.bf16.msra.mxu0 0
        %2304 = vmatprep.subr.bf16.mxu0 0
        %2305 = vmatpush1.bf16.msra.mxu0 0
        %2306 = vmatprep.subr.bf16.mxu0 0
        %2307 = vmatpush1.bf16.msra.mxu0 0
        %2308 = vmatprep.subr.bf16.mxu0 0
        %2309 = vmatpush1.bf16.msra.mxu0 0
        %2310 = vmatprep.subr.bf16.mxu0 %v755
        %2311 = vmatpush1.bf16.msra.mxu0 %v752
        %2312 = vmatprep.subr.bf16.mxu0 0
        %2313 = vmatpush2.bf16.msra.mxu0 0
        %2314 = vmatprep.subr.bf16.mxu0 0
        %2315 = vmatpush2.bf16.msra.mxu0 0
        %2316 = vmatprep.subr.bf16.mxu0 0
        %2317 = vmatpush2.bf16.msra.mxu0 0
        %2318 = vmatprep.subr.bf16.mxu0 0
        %2319 = vmatpush2.bf16.msra.mxu0 0
        %2320 = vmatprep.subr.bf16.mxu0 0
        %2321 = vmatpush2.bf16.msra.mxu0 0
        %2322 = vmatprep.subr.bf16.mxu0 0
        %2323 = vmatpush2.bf16.msra.mxu0 0
        %2324 = vmatprep.subr.bf16.mxu0 0
        %2325 = vmatpush2.bf16.msra.mxu0 0
        %2326 = vmatprep.subr.bf16.mxu0 0
        %2327 = vmatpush2.bf16.msra.mxu0 0
        %2328 = vmatprep.mubr.bf16.mxu0 0
        %2329 = vmatmul.mubr.bf16.gmra.mxu0 %v2294
        %v2330 = vpop.f32.mrf.mxu0
        %v2331 = vadd.f32 %v2291, %v2330
        %v2332 = vpop.f32.mrf.mxu0
        %v2333 = vadd.f32 %v2291, %v2332
        %v2334 = vpop.f32.mrf.mxu0
        %v2335 = vpop.f32.mrf.mxu0
        %2336 = vdwg.mxu0
        %2337 = vmatprep.subr.bf16.mxu0 0
        %2338 = vmatpush1.bf16.msra.mxu0 0
        %2339 = vmatprep.subr.bf16.mxu0 0
        %2340 = vmatpush1.bf16.msra.mxu0 0
        %2341 = vmatprep.subr.bf16.mxu0 0
        %2342 = vmatpush1.bf16.msra.mxu0 0
        %2343 = vmatprep.subr.bf16.mxu0 0
        %2344 = vmatpush1.bf16.msra.mxu0 0
        %2345 = vmatprep.subr.bf16.mxu0 0
        %2346 = vmatpush1.bf16.msra.mxu0 0
        %2347 = vmatprep.subr.bf16.mxu0 0
        %2348 = vmatpush1.bf16.msra.mxu0 0
        %2349 = vmatprep.subr.bf16.mxu0 0
        %2350 = vmatpush1.bf16.msra.mxu0 0
        %2351 = vmatprep.subr.bf16.mxu0 0
        %2352 = vmatpush1.bf16.msra.mxu0 %v758
        %2353 = vmatprep.subr.bf16.mxu0 0
        %2354 = vmatpush2.bf16.msra.mxu0 0
        %2355 = vmatprep.subr.bf16.mxu0 0
        %2356 = vmatpush2.bf16.msra.mxu0 0
        %2357 = vmatprep.subr.bf16.mxu0 0
        %2358 = vmatpush2.bf16.msra.mxu0 0
        %2359 = vmatprep.subr.bf16.mxu0 0
        %2360 = vmatpush2.bf16.msra.mxu0 0
        %2361 = vmatprep.subr.bf16.mxu0 0
        %2362 = vmatpush2.bf16.msra.mxu0 0
        %2363 = vmatprep.subr.bf16.mxu0 0
        %2364 = vmatpush2.bf16.msra.mxu0 0
        %2365 = vmatprep.subr.bf16.mxu0 0
        %2366 = vmatpush2.bf16.msra.mxu0 0
        %2367 = vmatprep.subr.bf16.mxu0 0
        %2368 = vmatpush2.bf16.msra.mxu0 0
        %2369 = vmatprep.mubr.bf16.mxu0 0
        %2370 = vmatmul.mubr.bf16.gmra.mxu0 %v2294
        %v2371 = vpop.f32.mrf.mxu0
        %v2372 = vadd.f32 %v2291, %v2371
        %v2373 = vpop.f32.mrf.mxu0
        %v2374 = vpop.f32.mrf.mxu0
        %v2375 = vpop.f32.mrf.mxu0
        %2376 = vdwg.mxu0
        %v2377 = vld [vmem:[%s5] sm:$0xff]
        %2379 = vset.pattern.permute.xlu0 0
        %2380 = vperm.xlu0 %2379, %v2377
        %v2381 = vpop.permute.xlu0 %2380
        %v2383 = vadd.f32 %v2283, %v2381
        %v2384 = vadd.f32 %v2284, %v2381
        %v2385 = vadd.f32 %v2285, %v2381
        %v2386 = vadd.f32 %v2383, %v2331
        %v2387 = vadd.f32 %v2384, %v2333
        %v2388 = vadd.f32 %v2385, %v2372
        %v2389 = vmax.f32 %v2386, 0.0
        %v2390 = vmax.f32 %v2387, 0.0
        %v2391 = vmax.f32 %v2388, 0.0
        %2392 = vst [vmem:[%s298] sm:$0xff] %v2389
        %2393 = vst [vmem:[%s298 + $0x8] sm:$0xff] %v2390
        %vm2394 = vcmask 261120
        %2395 = vst.msk [vmem:[%s298 + $0x10] sm:$0xff] %vm2394, %v2391
        %s2396 = sand.u32 %s203, 1
        %s2397 = scalar_lea.sflag [#allocation4], %s2396
        %s2398 = sand.u32 %s203, 1
        %s2399 = smul.addr %s2398, 24
        %s2400 = scalar_lea.vmem [#allocation3], %s2399
        // Predicated region
        $region53: #{tpu_custom_call.1} parent=51 // pred_check
          %p2401 = pneg %p213
        $region54: #{tpu_custom_call.1} parent=51 // pred_check_branch
          %2403 = sbr.rel (%p2401) target = $region56
        $region55: #{tpu_custom_call.1} parent=51 // pred_region
          %s2405 = ssub.s32 384, 384
          %2406 = vsyncadd %s2397, %s2405
          %s2407 = smul.addr %s22, 3
          %s2408 = smul.addr %s2407, 128
          %s2409 = scalar_lea.hbm %s8, %s2408
          %s2411 = sshll.u32 %s2400, 4
          %s2412 = int_to_ptr.vmem [resolvable:$true] %s2411
          %2414 = dma.vmem_to_hbm [thread:$0]  %s2412, 384, %s2409, %s2397
        $region56: #{tpu_custom_call.1} parent=51 // pred_fallthru
          _
      $region52: #{tpu_custom_call.1} parent=5 // pred_fallthru
        _
      %p2415 = scmp.le.s32.totalorder 2, %s17
      // Predicated region
      $region57: #{tpu_custom_call.1} parent=5 // pred_check
        %p2416 = pneg %p2415
      $region58: #{tpu_custom_call.1} parent=5 // pred_check_branch
        %2418 = sbr.rel (%p2416) target = $region60
      $region59: #{tpu_custom_call.1} parent=5 // pred_region
        %s2419 = ssub.s32 %s17, 2
        // Predicated region
        $region61: #{tpu_custom_call.1} parent=59 // pred_check
          %p2420 = pneg %p219
        $region62: #{tpu_custom_call.1} parent=59 // pred_check_branch
          %2422 = sbr.rel (%p2420) target = $region64
        $region63: #{tpu_custom_call.1} parent=59 // pred_region
          %s2423 = sand.u32 %s204, 1
          %s2424 = scalar_lea.sflag [#allocation4], %s2423
          %s2425 = sand.u32 %s204, 1
          %s2426 = smul.addr %s2425, 24
          %s2427 = scalar_lea.vmem [#allocation3], %s2426
          %2428 = dma.done %s2424, 384
        $region64: #{tpu_custom_call.1} parent=59 // pred_fallthru
          _
      $region60: #{tpu_custom_call.1} parent=5 // pred_fallthru
        _
    $region6: #{tpu_custom_call.1} parent=1 // loop_footer
      %s21 = sadd.s32 1, %s17
    $region7: #{tpu_custom_call.1} parent=1 // loop_footer_branch
      %16 = sbr.rel target = $region3
    $region8: #{tpu_custom_call.1} parent=1 // loop_exit
      _
    %2429 = vsyncpa [#allocation4], 1
    %s2430 = scalar_lea.sflag [#allocation4], 1
    %2431 = vsyncpa %s2430, 1

</llo_original>
